<compile_context>
chip_gen: v5e
topology: v5e:2x2
jax: 0.10.0
libtpu: 0.0.40
codegen_flags: <defaults>
</compile_context>

<pallas_src>
import functools
import numpy as np
import jax
import jax.numpy as jnp
from jax.experimental import pallas as pl
from jax.experimental.pallas import tpu as pltpu

BN_EPS = 1e-5
BN_SCALE = float(1.0 / np.sqrt(1.0 + BN_EPS))
VMEM_LIMIT = 32 * 1024 * 1024          # <= v7x scoped budget, fine on v5e/v6e
K_TILE = 512                           # K tiling kicks in only for K > 2048
MAX_A_TILE_BYTES = 4 * 1024 * 1024


def _round_up(x, m):
    return ((x + m - 1) // m) * m


# ----------------------------------------------------------------------------
# Tile selection helpers (all static, trace-time)
# ----------------------------------------------------------------------------
def _pick_tile_k(K):
    """Return (Kp, tk, nk).  K stays a single full-extent block unless huge."""
    if K <= 2048:
        return K, K, 1
    Kp = _round_up(K, K_TILE)
    return Kp, K_TILE, Kp // K_TILE


def _pick_tile_m(M, bytes_per_row):
    Mp = _round_up(max(M, 8), 8)
    tm = 8
    for cand in (512, 256, 128, 64, 32, 16, 8):
        if Mp % cand == 0:
            tm = cand
            break
    while tm > 8 and tm * bytes_per_row > MAX_A_TILE_BYTES:
        tm //= 2
    return Mp, tm


def _pick_tile_n(N):
    if N % 256 == 0:
        return 256
    if N % 128 == 0:
        return 128
    return N   # full-extent block (allowed; small channel counts in HRNet)


def _pick_rows(M):
    Mp = _round_up(max(M, 8), 8)
    for cand in (1024, 512, 256, 128, 64, 32, 16, 8):
        if Mp % cand == 0:
            return Mp, cand
    return Mp, 8


# ----------------------------------------------------------------------------
# Pallas kernels
# ----------------------------------------------------------------------------
def _matmul_kernel(*refs, relu, nk, has_res):
    """Tiled matmul + bias (+ residual) (+ ReLU).  f32 accumulator scratch."""
    if has_res:
        a_ref, w_ref, b_ref, r_ref, o_ref, acc_ref = refs
    else:
        a_ref, w_ref, b_ref, o_ref, acc_ref = refs
        r_ref = None
    kstep = pl.program_id(2)

    @pl.when(kstep == 0)
    def _():
        acc_ref[...] = jnp.zeros_like(acc_ref)

    a = a_ref[...].astype(jnp.bfloat16)          # bf16 MXU operands
    acc_ref[...] += jnp.dot(a, w_ref[...], preferred_element_type=jnp.float32)

    @pl.when(kstep == nk - 1)
    def _():
        out = acc_ref[...] + b_ref[...]
        if has_res:
            out = out + r_ref[...]
        if relu:
            out = jnp.maximum(out, 0.0)
        o_ref[...] = out


def _matmul_bias_act(a, wmat, bvec, residual, relu):
    """out = act((a @ wmat) + bias [+ residual]).  wmat is (Kp, N) bf16."""
    M, Kp = a.shape
    Kp2, N = wmat.shape
    assert Kp == Kp2, (Kp, Kp2)
    if Kp <= 2048:
        tk, nk = Kp, 1
    else:
        tk, nk = K_TILE, Kp // K_TILE
    Mp, tm = _pick_tile_m(M, Kp * a.dtype.itemsize)
    tn = _pick_tile_n(N)
    if Mp != M:
        a = jnp.pad(a, ((0, Mp - M), (0, 0)))
        if residual is not None:
            residual = jnp.pad(residual, ((0, Mp - M), (0, 0)))
    has_res = residual is not None

    in_specs = [
        pl.BlockSpec((tm, tk), lambda i, j, k: (i, k)),
        pl.BlockSpec((tk, tn), lambda i, j, k: (k, j)),
        pl.BlockSpec((1, tn), lambda i, j, k: (0, j)),
    ]
    args = [a, wmat, bvec]
    if has_res:
        in_specs.append(pl.BlockSpec((tm, tn), lambda i, j, k: (i, j)))
        args.append(residual)

    out = pl.pallas_call(
        functools.partial(_matmul_kernel, relu=relu, nk=nk, has_res=has_res),
        out_shape=jax.ShapeDtypeStruct((Mp, N), jnp.float32),
        grid=(Mp // tm, N // tn, nk),
        in_specs=in_specs,
        out_specs=pl.BlockSpec((tm, tn), lambda i, j, k: (i, j)),
        scratch_shapes=[pltpu.VMEM((tm, tn), jnp.float32)],
        compiler_params=pltpu.CompilerParams(
            dimension_semantics=("parallel", "parallel", "arbitrary"),
            vmem_limit_bytes=VMEM_LIMIT),
    )(*args)
    if Mp != M:
        out = out[:M]
    return out


def _sum_relu_kernel(*refs):
    o_ref = refs[-1]
    acc = refs[0][...]
    for r in refs[1:-1]:
        acc = acc + r[...]
    o_ref[...] = jnp.maximum(acc, 0.0)


@jax.jit
def sum_relu(*xs):
    """relu(sum(xs)) over NHWC tensors of identical shape (tiled over rows)."""
    shp = xs[0].shape
    C = shp[-1]
    M = int(np.prod(shp[:-1]))
    flats = [x.reshape(M, C) for x in xs]
    Mp, tm = _pick_rows(M)
    if Mp != M:
        flats = [jnp.pad(f, ((0, Mp - M), (0, 0))) for f in flats]
    n = len(flats)
    out = pl.pallas_call(
        _sum_relu_kernel,
        out_shape=jax.ShapeDtypeStruct((Mp, C), jnp.float32),
        grid=(Mp // tm,),
        in_specs=[pl.BlockSpec((tm, C), lambda i: (i, 0)) for _ in range(n)],
        out_specs=pl.BlockSpec((tm, C), lambda i: (i, 0)),
        compiler_params=pltpu.CompilerParams(
            dimension_semantics=("parallel",),
            vmem_limit_bytes=VMEM_LIMIT),
    )(*flats)
    if Mp != M:
        out = out[:M]
    return out.reshape(shp)


def _pam_attn_kernel(q_ref, k_ref, v_ref, o_ref):
    q = q_ref[0]                                          # (tq, Cq) bf16
    k = k_ref[0]                                          # (N,  Cq) bf16
    v = v_ref[0]                                          # (N,  C ) bf16
    energy = jax.lax.dot_general(
        q, k, (((1,), (1,)), ((), ())),
        preferred_element_type=jnp.float32)               # (tq, N)
    m = jnp.max(energy, axis=-1, keepdims=True)
    p = jnp.exp(energy - m)
    att = p / jnp.sum(p, axis=-1, keepdims=True)
    o_ref[0] = jnp.dot(att.astype(jnp.bfloat16), v,
                       preferred_element_type=jnp.float32)  # (tq, C) NHWC order


@jax.jit
def _pam_attention(q, k, v):
    """q,k: (B,N,Cq)  v: (B,N,C)  ->  (B,N,C) = softmax(q k^T) @ v."""
    B, N, Cq = q.shape
    C = v.shape[-1]
    tq = min(256, _round_up(N, 8))
    Nq = _round_up(N, tq)
    qb = q.astype(jnp.bfloat16)
    if Nq != N:
        qb = jnp.pad(qb, ((0, 0), (0, Nq - N), (0, 0)))
    kb = k.astype(jnp.bfloat16)
    vb = v.astype(jnp.bfloat16)
    out = pl.pallas_call(
        _pam_attn_kernel,
        out_shape=jax.ShapeDtypeStruct((B, Nq, C), jnp.float32),
        grid=(B, Nq // tq),
        in_specs=[
            pl.BlockSpec((1, tq, Cq), lambda b, i: (b, i, 0)),
            pl.BlockSpec((1, N, Cq), lambda b, i: (b, 0, 0)),
            pl.BlockSpec((1, N, C), lambda b, i: (b, 0, 0)),
        ],
        out_specs=pl.BlockSpec((1, tq, C), lambda b, i: (b, i, 0)),
        compiler_params=pltpu.CompilerParams(
            dimension_semantics=("parallel", "parallel"),
            vmem_limit_bytes=VMEM_LIMIT),
    )(qb, kb, vb)
    return out[:, :N]


# ----------------------------------------------------------------------------
# Conv wrapper: im2col (plain JAX) + fused Pallas matmul
# ----------------------------------------------------------------------------
@functools.partial(jax.jit, static_argnames=("kh", "kw", "stride", "pad", "relu"))
def _conv_fwd_impl(x, wmat, bvec, residual, *, kh, kw, stride, pad, relu):
    B, H, W, Cin = x.shape
    Kp, Cout = wmat.shape
    K = kh * kw * Cin
    if kh == 1 and kw == 1 and stride == 1 and pad == 0:
        Ho, Wo = H, W
        a = x.reshape(B * H * W, Cin)        # free reshape; cast to bf16 in-kernel
    else:
        xp = x.astype(jnp.bfloat16)          # im2col written in bf16 (half bytes)
        if pad > 0:
            xp = jnp.pad(xp, ((0, 0), (pad, pad), (pad, pad), (0, 0)))
        Hp, Wp = xp.shape[1], xp.shape[2]
        Ho = (Hp - kh) // stride + 1
        Wo = (Wp - kw) // stride + 1
        taps = []
        for di in range(kh):
            for dj in range(kw):
                taps.append(xp[:, di:di + stride * (Ho - 1) + 1:stride,
                               dj:dj + stride * (Wo - 1) + 1:stride, :])
        a = jnp.concatenate(taps, axis=-1).reshape(B * Ho * Wo, K)
    if Kp != K:
        a = jnp.pad(a, ((0, 0), (0, Kp - K)))
    M = B * Ho * Wo
    res2 = None if residual is None else residual.reshape(M, Cout).astype(jnp.float32)
    out = _matmul_bias_act(a, wmat, bvec, res2, relu)
    return out.reshape(B, Ho, Wo, Cout)


def conv_fwd(x, layer, stride, pad, relu, residual=None):
    return _conv_fwd_impl(x, layer['w'], layer['b'], residual,
                          kh=layer['kh'], kw=layer['kw'],
                          stride=stride, pad=pad, relu=bool(relu))


@jax.jit
def dilate2x(x):
    B, H, W, C = x.shape
    out = jnp.zeros((B, (H - 1) * 2 + 1, (W - 1) * 2 + 1, C), x.dtype)
    return out.at[:, ::2, ::2, :].set(x)


@functools.partial(jax.jit, static_argnames=("oh", "ow"))
def bilinear_resize(x, *, oh, ow):
    """F.interpolate(mode='bilinear', align_corners=True), NHWC."""
    B, H, W, C = x.shape
    if oh == H and ow == W:
        return x

    def grid(o, i):
        if o == 1:
            return jnp.zeros((o,), jnp.float32)
        return jnp.arange(o, dtype=jnp.float32) * (float(i - 1) / float(o - 1))

    ys = grid(oh, H)
    xs = grid(ow, W)
    y0 = jnp.clip(jnp.floor(ys).astype(jnp.int32), 0, H - 1)
    y1 = jnp.clip(y0 + 1, 0, H - 1)
    x0 = jnp.clip(jnp.floor(xs).astype(jnp.int32), 0, W - 1)
    x1 = jnp.clip(x0 + 1, 0, W - 1)
    wy = (ys - y0.astype(jnp.float32))[None, :, None, None]
    wx = (xs - x0.astype(jnp.float32))[None, None, :, None]

    def g(yi, xi):
        return x[:, yi][:, :, xi]

    top = g(y0, x0) * (1 - wx) + g(y0, x1) * wx
    bot = g(y1, x0) * (1 - wx) + g(y1, x1) * wx
    return top * (1 - wy) + bot * wy


# ----------------------------------------------------------------------------
# Deterministic parameter construction (BN folded, weights pre-reshaped bf16)
# ----------------------------------------------------------------------------
class KeyGen:
    def __init__(self, seed):
        self.key = jax.random.PRNGKey(seed)

    def __call__(self):
        self.key, k = jax.random.split(self.key)
        return k


KG = KeyGen(0)


def _rand_weight(kh, kw, cin, cout):
    std = 1.0 / np.sqrt(kh * kw * cin)
    return jax.random.normal(KG(), (kh, kw, cin, cout), jnp.float32) * std


def _rand_bias(c):
    return jax.random.normal(KG(), (c,), jnp.float32) * 0.1


def _fold(w, scale, bias):
    """(kh,kw,cin,cout) conv weight -> {(Kp,cout) bf16, (1,cout) f32 bias}."""
    kh, kw, cin, cout = w.shape
    K = kh * kw * cin
    Kp, _, _ = _pick_tile_k(K)
    wm = (w.reshape(K, cout) * scale).astype(jnp.bfloat16)
    if Kp != K:
        wm = jnp.pad(wm, ((0, Kp - K), (0, 0)))
    return {'w': wm, 'b': jnp.reshape(bias, (1, cout)).astype(jnp.float32),
            'kh': kh, 'kw': kw}


def make_conv_bn(kh, kw, cin, cout):
    # Conv2d(bias=False) + BN(eval)  ->  w * BN_SCALE, bias 0
    return _fold(_rand_weight(kh, kw, cin, cout), BN_SCALE,
                 jnp.zeros((cout,), jnp.float32))


def make_conv_bias(kh, kw, cin, cout):
    # Conv2d(bias=True), no BN
    return _fold(_rand_weight(kh, kw, cin, cout), 1.0, _rand_bias(cout))


def make_conv_bias_bn(kh, kw, cin, cout):
    # BN(Conv2d(x) + b)  ->  conv * s  +  b * s
    return _fold(_rand_weight(kh, kw, cin, cout), BN_SCALE,
                 _rand_bias(cout) * BN_SCALE)


def make_deconv_bn(cin, cout, k=4):
    # ConvTranspose2d(k=4,s=2,p=1,bias=False) == conv(dilate2x(x), pad=2) with
    # the spatially flipped kernel and (cin,cout) axes moved to conv layout.
    std = 1.0 / np.sqrt(k * k * cin)
    wt = jax.random.normal(KG(), (cin, cout, k, k), jnp.float32) * std
    wconv = jnp.flip(jnp.transpose(wt, (2, 3, 0, 1)), axis=(0, 1))
    return _fold(wconv, BN_SCALE, jnp.zeros((cout,), jnp.float32))


def make_basic_block(cin, planes, stride=1):
    p = {'stride': stride,
         'conv1': make_conv_bn(3, 3, cin, planes),
         'conv2': make_conv_bn(3, 3, planes, planes)}
    if stride != 1 or cin != planes:
        p['down'] = make_conv_bn(1, 1, cin, planes)
    return p


def make_bottleneck(cin, planes, stride=1):
    p = {'stride': stride,
         'conv1': make_conv_bn(1, 1, cin, planes),
         'conv2': make_conv_bn(3, 3, planes, planes),
         'conv3': make_conv_bn(1, 1, planes, planes * 4)}
    if stride != 1 or cin != planes * 4:
        p['down'] = make_conv_bn(1, 1, cin, planes * 4)
    return p


def make_block(block, cin, planes, stride=1):
    return make_bottleneck(cin, planes, stride) if block == 'BOTTLENECK' \
        else make_basic_block(cin, planes, stride)


def basic_block_fwd(x, p):
    out = conv_fwd(x, p['conv1'], p['stride'], 1, relu=True)
    res = x if 'down' not in p else conv_fwd(x, p['down'], p['stride'], 0, relu=False)
    # residual add + final ReLU fused into the last conv's epilogue
    return conv_fwd(out, p['conv2'], 1, 1, relu=True, residual=res)


def bottleneck_fwd(x, p):
    out = conv_fwd(x, p['conv1'], 1, 0, relu=True)
    out = conv_fwd(out, p['conv2'], p['stride'], 1, relu=True)
    res = x if 'down' not in p else conv_fwd(x, p['down'], p['stride'], 0, relu=False)
    return conv_fwd(out, p['conv3'], 1, 0, relu=True, residual=res)


def block_fwd(block, x, p):
    return bottleneck_fwd(x, p) if block == 'BOTTLENECK' else basic_block_fwd(x, p)


def make_hr_module(num_branches, block, num_blocks, num_inchannels, num_channels,
                   multi_scale_output=True):
    exp = 4 if block == 'BOTTLENECK' else 1
    nin = list(num_inchannels)
    branches = []
    for i in range(num_branches):
        blocks = [make_block(block, nin[i], num_channels[i], 1)]
        nin[i] = num_channels[i] * exp
        for _ in range(1, num_blocks[i]):
            blocks.append(make_block(block, nin[i], num_channels[i], 1))
        branches.append(blocks)
    fuse = None
    if num_branches > 1:
        fuse = []
        n_out = num_branches if multi_scale_output else 1
        for i in range(n_out):
            row = []
            for j in range(num_branches):
                if j > i:
                    row.append({'type': 'up', 'conv': make_conv_bn(1, 1, nin[j], nin[i])})
                elif j == i:
                    row.append(None)
                else:
                    convs = []
                    for kk in range(i - j):
                        if kk == i - j - 1:
                            convs.append({'conv': make_conv_bn(3, 3, nin[j], nin[i]),
                                          'relu': False})
                        else:
                            convs.append({'conv': make_conv_bn(3, 3, nin[j], nin[j]),
                                          'relu': True})
                    row.append({'type': 'down', 'convs': convs})
            fuse.append(row)
    return {'branches': branches, 'fuse': fuse, 'block': block,
            'num_inchannels': nin}


def hr_module_fwd(xs, p):
    nb = len(p['branches'])
    xs = list(xs)
    for i in range(nb):
        for bp in p['branches'][i]:
            xs[i] = block_fwd(p['block'], xs[i], bp)
    if nb == 1:
        return xs
    out = []
    for i, row in enumerate(p['fuse']):
        terms = []
        for j in range(nb):
            if j == i:
                terms.append(xs[j])
            elif j > i:
                t = conv_fwd(xs[j], row[j]['conv'], 1, 0, relu=False)
                t = bilinear_resize(t, oh=xs[i].shape[1], ow=xs[i].shape[2])
                terms.append(t)
            else:
                t = xs[j]
                for cp in row[j]['convs']:
                    t = conv_fwd(t, cp['conv'], 2, 1, relu=cp['relu'])
                terms.append(t)
        out.append(sum_relu(*terms))
    return out


def make_transition(pre, cur):
    layers = []
    nb_pre = len(pre)
    for i in range(len(cur)):
        if i < nb_pre:
            if cur[i] != pre[i]:
                layers.append({'type': 'conv', 'conv': make_conv_bn(3, 3, pre[i], cur[i])})
            else:
                layers.append(None)
        else:
            convs = []
            for j in range(i + 1 - nb_pre):
                inc = pre[-1]
                outc = cur[i] if j == i - nb_pre else inc
                convs.append(make_conv_bn(3, 3, inc, outc))
            layers.append({'type': 'downs', 'convs': convs})
    return layers


def transition_fwd(layer, x):
    if layer is None:
        return x
    if layer['type'] == 'conv':
        return conv_fwd(x, layer['conv'], 1, 1, relu=True)
    t = x
    for lw in layer['convs']:
        t = conv_fwd(t, lw, 2, 1, relu=True)
    return t


def make_stage(scfg, num_inchannels, multi_scale_output=True):
    mods = []
    nin = list(num_inchannels)
    for m in range(scfg['NUM_MODULES']):
        mso = True if (multi_scale_output or m != scfg['NUM_MODULES'] - 1) else False
        mod = make_hr_module(scfg['NUM_BRANCHES'], scfg['BLOCK'], scfg['NUM_BLOCKS'],
                             nin, scfg['NUM_CHANNELS'], mso)
        nin = mod['num_inchannels']
        mods.append(mod)
    return mods, nin


def stage_fwd(xs, modules):
    for mod in modules:
        xs = hr_module_fwd(xs, mod)
    return xs


def build_params(cfg):
    P = {'cfg': cfg}
    P['conv1'] = make_conv_bn(3, 3, 3, 64)
    P['conv2'] = make_conv_bn(3, 3, 64, 64)

    s1 = cfg['STAGE1']
    exp1 = 4 if s1['BLOCK'] == 'BOTTLENECK' else 1
    nch, nbl = s1['NUM_CHANNELS'][0], s1['NUM_BLOCKS'][0]
    layer1 = [make_block(s1['BLOCK'], 64, nch, 1)]
    inpl = nch * exp1
    for _ in range(1, nbl):
        layer1.append(make_block(s1['BLOCK'], inpl, nch, 1))
    P['layer1'] = layer1
    P['layer1_block'] = s1['BLOCK']
    stage1_out = nch * exp1

    s2 = cfg['STAGE2']
    ch2 = [c * (4 if s2['BLOCK'] == 'BOTTLENECK' else 1) for c in s2['NUM_CHANNELS']]
    P['transition1'] = make_transition([stage1_out], ch2)
    P['stage2'], pre = make_stage(s2, ch2)

    s3 = cfg['STAGE3']
    ch3 = [c * (4 if s3['BLOCK'] == 'BOTTLENECK' else 1) for c in s3['NUM_CHANNELS']]
    P['transition2'] = make_transition(pre, ch3)
    P['stage3'], pre = make_stage(s3, ch3)

    s4 = cfg['STAGE4']
    ch4 = [c * (4 if s4['BLOCK'] == 'BOTTLENECK' else 1) for c in s4['NUM_CHANNELS']]
    P['transition3'] = make_transition(pre, ch4)
    P['stage4'], pre = make_stage(s4, ch4, multi_scale_output=True)

    last = int(np.sum(pre))
    ncls = cfg['NUM_CLASSES']
    P['last_channels'] = last
    # aux head: conv(bias)+BN+ReLU then conv(bias)
    P['aux1'] = make_conv_bias_bn(1, 1, last, last)
    P['aux2'] = make_conv_bias(1, 1, last, ncls)
    # PAM branch
    P['pam_conv'] = make_conv_bn(3, 3, last, last)
    cq = max(last // 8, 1)
    P['pam'] = {'q': make_conv_bias(1, 1, last, cq),
                'k': make_conv_bias(1, 1, last, cq),
                'v': make_conv_bias(1, 1, last, last),
                'gamma': jnp.float32(0.1)}
    P['pam_deconv'] = make_deconv_bn(last, last // 2, 4)
    # cls head (FINAL_CONV_KERNEL == 1 -> padding 0)
    kf = cfg['FINAL_CONV_KERNEL']
    P['cls'] = make_conv_bias(kf, kf, last + last // 2, ncls)
    return P


def pam_fwd(x, p):
    B, H, W, C = x.shape
    N = H * W
    q = conv_fwd(x, p['q'], 1, 0, relu=False)
    k = conv_fwd(x, p['k'], 1, 0, relu=False)
    v = conv_fwd(x, p['v'], 1, 0, relu=False)
    Cq = q.shape[-1]
    att = _pam_attention(q.reshape(B, N, Cq), k.reshape(B, N, Cq),
                         v.reshape(B, N, C))
    out = att.reshape(B, H, W, C)
    return p['gamma'] * out + x


def hrnet_forward(P, x_nchw):
    cfg = P['cfg']
    x = jnp.transpose(x_nchw, (0, 2, 3, 1)).astype(jnp.float32)   # NCHW -> NHWC

    # stem
    x = conv_fwd(x, P['conv1'], 2, 1, relu=True)
    x = conv_fwd(x, P['conv2'], 2, 1, relu=True)

    # layer1
    for bp in P['layer1']:
        x = block_fwd(P['layer1_block'], x, bp)

    # stage2
    xs = [transition_fwd(t, x) for t in P['transition1']]
    ys = stage_fwd(xs, P['stage2'])

    # stage3
    nb2 = cfg['STAGE2']['NUM_BRANCHES']
    xs = []
    for i, t in enumerate(P['transition2']):
        if t is not None:
            src = ys[i] if i < nb2 else ys[-1]
            xs.append(transition_fwd(t, src))
        else:
            xs.append(ys[i])
    ys = stage_fwd(xs, P['stage3'])

    # stage4
    nb3 = cfg['STAGE3']['NUM_BRANCHES']
    xs = []
    for i, t in enumerate(P['transition3']):
        if t is not None:
            src = ys[i] if i < nb3 else ys[-1]
            xs.append(transition_fwd(t, src))
        else:
            xs.append(ys[i])
    xlist = stage_fwd(xs, P['stage4'])

    # multi-scale concat at the highest resolution
    x0 = xlist[0]
    h0, w0 = x0.shape[1], x0.shape[2]
    ups = [x0] + [bilinear_resize(xi, oh=h0, ow=w0) for xi in xlist[1:]]
    feats = jnp.concatenate(ups, axis=-1)

    # aux head (computed as in the reference forward; not returned in eval mode)
    aux = conv_fwd(feats, P['aux1'], 1, 0, relu=True)
    _out_aux = conv_fwd(aux, P['aux2'], 1, 0, relu=False)

    # PAM branch: conv/2 -> position attention -> ConvTranspose x2
    pfeat = conv_fwd(feats, P['pam_conv'], 2, 1, relu=True)
    pfeat = pam_fwd(pfeat, P['pam'])
    pfeat = conv_fwd(dilate2x(pfeat), P['pam_deconv'], 1, 2, relu=True)

    feats2 = jnp.concatenate([feats, pfeat], axis=-1)
    pad = 1 if cfg['FINAL_CONV_KERNEL'] == 3 else 0
    out = conv_fwd(feats2, P['cls'], 1, pad, relu=False)
    return jnp.transpose(out, (0, 3, 1, 2))        # back to NCHW


if __name__ == "__main__":
    # Small synthetic HRNet config (same structure as the PyTorch module, scaled down)
    cfg = {
        'STAGE1': {'NUM_MODULES': 1, 'NUM_BRANCHES': 1, 'BLOCK': 'BOTTLENECK',
                   'NUM_BLOCKS': [1], 'NUM_CHANNELS': [8], 'FUSE_METHOD': 'SUM'},
        'STAGE2': {'NUM_MODULES': 1, 'NUM_BRANCHES': 2, 'BLOCK': 'BASIC',
                   'NUM_BLOCKS': [1, 1], 'NUM_CHANNELS': [8, 16], 'FUSE_METHOD': 'SUM'},
        'STAGE3': {'NUM_MODULES': 1, 'NUM_BRANCHES': 3, 'BLOCK': 'BASIC',
                   'NUM_BLOCKS': [1, 1, 1], 'NUM_CHANNELS': [8, 16, 32], 'FUSE_METHOD': 'SUM'},
        'STAGE4': {'NUM_MODULES': 1, 'NUM_BRANCHES': 4, 'BLOCK': 'BASIC',
                   'NUM_BLOCKS': [1, 1, 1, 1], 'NUM_CHANNELS': [8, 16, 32, 64],
                   'FUSE_METHOD': 'SUM'},
        'FINAL_CONV_KERNEL': 1,
        'NUM_CLASSES': 4,
    }
    params = build_params(cfg)

    x = jax.random.normal(jax.random.PRNGKey(0), (2, 3, 64, 64), jnp.float32)
    out = hrnet_forward(params, x)
    out = jax.block_until_ready(out)
    assert out.shape == (2, cfg['NUM_CLASSES'], 16, 16), out.shape
    assert bool(jnp.all(jnp.isfinite(out)))
    print("KERNEL_OK")
</pallas_src>

<mosaic_0001>
module attributes {stable_mosaic.version = 11 : i64} {
  func.func @_matmul_kernel(%arg0: i32, %arg1: i32, %arg2: i32, %arg3: memref<512x27xbf16, #tpu.memory_space<vmem>>, %arg4: memref<27x64xbf16, #tpu.memory_space<vmem>>, %arg5: memref<1x64xf32, #tpu.memory_space<vmem>>, %arg6: memref<512x64xf32, #tpu.memory_space<vmem>>, %arg7: memref<512x64xf32, #tpu.memory_space<vmem>>) attributes {dimension_semantics = [#tpu.dimension_semantics<parallel>, #tpu.dimension_semantics<parallel>, #tpu.dimension_semantics<arbitrary>], iteration_bounds = array<i64: 4, 1, 1>, scalar_prefetch = 0 : i64, scratch_operands = 1 : i64, tpu.core_type = #tpu.core_type<tc>, window_params = [{transform_indices = @transform_0, window_bounds = array<i64: 512, 27>}, {transform_indices = @transform_1, window_bounds = array<i64: 27, 64>}, {transform_indices = @transform_2, window_bounds = array<i64: 1, 64>}, {transform_indices = @transform_3, window_bounds = array<i64: 512, 64>}]} {
    %c0_i32 = arith.constant 0 : i32
    %0 = arith.cmpi eq, %arg2, %c0_i32 : i32
    %1 = arith.extui %0 : i1 to i32
    %c0_i32_0 = arith.constant 0 : i32
    %2 = arith.cmpi ne, %1, %c0_i32_0 : i32
    scf.if %2 {
      %cst_10 = arith.constant 0.000000e+00 : f32
      %12 = vector.broadcast %cst_10 : f32 to vector<512x64xf32>
      %c0_11 = arith.constant 0 : index
      %c0_12 = arith.constant 0 : index
      %13 = vector.load %arg7[%c0_11, %c0_12] : memref<512x64xf32, #tpu.memory_space<vmem>>, vector<512x64xf32>
      tpu.vector_store %arg7[%c0_11, %c0_12], %12 {strides = array<i32>} : memref<512x64xf32, #tpu.memory_space<vmem>>, vector<512x64xf32>,
    } else {
    }
    %c0 = arith.constant 0 : index
    %c0_1 = arith.constant 0 : index
    %3 = vector.load %arg3[%c0, %c0_1] : memref<512x27xbf16, #tpu.memory_space<vmem>>, vector<512x27xbf16>
    %c0_2 = arith.constant 0 : index
    %c0_3 = arith.constant 0 : index
    %4 = vector.load %arg7[%c0_2, %c0_3] : memref<512x64xf32, #tpu.memory_space<vmem>>, vector<512x64xf32>
    %c0_4 = arith.constant 0 : index
    %c0_5 = arith.constant 0 : index
    %5 = vector.load %arg4[%c0_4, %c0_5] : memref<27x64xbf16, #tpu.memory_space<vmem>>, vector<27x64xbf16>
    %cst = arith.constant dense<0.000000e+00> : vector<512x64xf32>
    %6 = tpu.matmul %3, %5, %cst {dimension_numbers = #tpu.dot_dimension_numbers<[1], [0], [0], [1], [0, 0, 1, 1], [], []>} : vector<512x27xbf16>, vector<27x64xbf16>, vector<512x64xf32> -> vector<512x64xf32>
    %7 = arith.addf %4, %6 : vector<512x64xf32>
    %c0_6 = arith.constant 0 : index
    %c0_7 = arith.constant 0 : index
    %8 = vector.load %arg7[%c0_6, %c0_7] : memref<512x64xf32, #tpu.memory_space<vmem>>, vector<512x64xf32>
    tpu.vector_store %arg7[%c0_6, %c0_7], %7 {strides = array<i32>} : memref<512x64xf32, #tpu.memory_space<vmem>>, vector<512x64xf32>,
    %c0_i32_8 = arith.constant 0 : i32
    %9 = arith.cmpi eq, %arg2, %c0_i32_8 : i32
    %10 = arith.extui %9 : i1 to i32
    %c0_i32_9 = arith.constant 0 : i32
    %11 = arith.cmpi ne, %10, %c0_i32_9 : i32
    scf.if %11 {
      %c0_10 = arith.constant 0 : index
      %c0_11 = arith.constant 0 : index
      %12 = vector.load %arg7[%c0_10, %c0_11] : memref<512x64xf32, #tpu.memory_space<vmem>>, vector<512x64xf32>
      %c0_12 = arith.constant 0 : index
      %c0_13 = arith.constant 0 : index
      %13 = vector.load %arg5[%c0_12, %c0_13] : memref<1x64xf32, #tpu.memory_space<vmem>>, vector<1x64xf32>
      %14 = vector.broadcast %13 : vector<1x64xf32> to vector<512x64xf32>
      %15 = arith.addf %12, %14 : vector<512x64xf32>
      %cst_14 = arith.constant 0.000000e+00 : f32
      %16 = vector.broadcast %cst_14 : f32 to vector<512x64xf32>
      %17 = arith.maximumf %15, %16 : vector<512x64xf32>
      %c0_15 = arith.constant 0 : index
      %c0_16 = arith.constant 0 : index
      %18 = vector.load %arg6[%c0_15, %c0_16] : memref<512x64xf32, #tpu.memory_space<vmem>>, vector<512x64xf32>
      tpu.vector_store %arg6[%c0_15, %c0_16], %17 {strides = array<i32>} : memref<512x64xf32, #tpu.memory_space<vmem>>, vector<512x64xf32>,
    } else {
    }
    return
  }
  func.func @transform_0(%arg0: i32, %arg1: i32, %arg2: i32) -> (i32, i32) {
    %c0_i32 = arith.constant 0 : i32
    return %arg0, %arg2 : i32, i32
  }
  func.func @transform_1(%arg0: i32, %arg1: i32, %arg2: i32) -> (i32, i32) {
    %c0_i32 = arith.constant 0 : i32
    return %arg2, %arg1 : i32, i32
  }
  func.func @transform_2(%arg0: i32, %arg1: i32, %arg2: i32) -> (i32, i32) {
    %c0_i32 = arith.constant 0 : i32
    %c0_i32_0 = arith.constant 0 : i32
    return %c0_i32, %arg1 : i32, i32
  }
  func.func @transform_3(%arg0: i32, %arg1: i32, %arg2: i32) -> (i32, i32) {
    %c0_i32 = arith.constant 0 : i32
    return %arg0, %arg1 : i32, i32
  }
}

</mosaic_0001>

<llo_original>
// kernel: _conv_fwd_impl.1
$region0: #{_conv_fwd_impl.1}
  #allocation0 [shape = 'u32[]', space=smem, size = 0x4, offset = 0x4, fixed_abs, tag = 'smem constant byte address 0x4 - core index']
  #allocation1 [shape = 'u32[72,128]{1,0:T(1,128)}', space=vmem, size = 0x9000, scoped, tag = 'internal scratch']
  #allocation2 [shape = 'f32[512,64]{1,0:T(8,128)}', space=vmem, size = 0x40000, scoped, tag = 'scratch operand']
  %s0 = inlined_call_operand.vmem [shape: bf16[2048,27], index: 0, kind: input, shape index: {}]
  %s1 = inlined_call_operand.vmem [shape: bf16[27,64], index: 1, kind: input, shape index: {}]
  %s2 = inlined_call_operand.vmem [shape: f32[1,64], index: 2, kind: input, shape index: {}]
  %s3 = inlined_call_operand.hbm [shape: f32[2048,64], index: 3, kind: output, shape index: {}]
  %s4 = sld [smem:[#allocation0]]
  $region53: #{_conv_fwd_impl.1} parent=0
    _
  %s6 = ssub.s32 1, %s4
  %s7 = scalar_select 0, %s6, %s4
  $region1: #{_conv_fwd_impl.1} parent=0
    #allocation3 [shape = 'u8[524288]{0}', space=vmem, size = 0x80000, scoped, tag = 'output window, operand 0']
    #allocation4 [shape = 's32[2]{0}', space=sflag, size = 0x8, scoped, tag = 'scoped memory for _conv_fwd_impl.1']
    %8 = vsyncpa [#allocation4], 0
    %s9 = scalar_lea.sflag [#allocation4], 1
    %10 = vsyncpa %s9, 0
    loop: start=0, step=1, limit=6
    $region2: #{_conv_fwd_impl.1} parent=1 // loop_pre_header
      _
    $region3: #{_conv_fwd_impl.1} parent=1 // loop_header
      %s12 = sphi 0, %s16
      %p13 = scmp.ge.s32.totalorder %s12, 6
      %s19 = sphi 0, %s38
      %s20 = sphi 0, %s34
      %s21 = sphi 0, %s30
      %s22 = sphi 0, %s19
      %s23 = sphi 0, %s20
      %s24 = sphi 0, %s21
      %s25 = sphi 0, %s22
      %s26 = sphi 0, %s23
      %s27 = sphi 0, %s24
      %s43 = sphi 0, %s45
      %s46 = sphi 0, %s43
      %s47 = sphi 0, %s46
      %s63 = sphi 0, %s47
      %s71 = sphi 0, %s73
      %s74 = sphi 0, %s71
      %s75 = sphi 0, %s74
      %s91 = sphi 0, %s75
      %s97 = sphi 0, %s99
      %s100 = sphi 0, %s97
      %s101 = sphi 0, %s100
      %s117 = sphi 0, %s101
      %s125 = sphi 0, %s127
      %s128 = sphi 0, %s125
      %s129 = sphi 0, %s128
      %s145 = sphi 0, %s129
    $region4: #{_conv_fwd_impl.1} parent=1 // loop_header_branch
      %15 = sbr.rel (%p13) target = $region8
    $region5: #{_conv_fwd_impl.1} parent=1 // loop_body
      %s17 = ssub.s32 %s12, 1
      %s18 = ssub.s32 %s12, 2
      %s28 = sadd.s32 1, %s21
      %p29 = scmp.ge.s32.totalorder %s28, 1
      %s30 = scalar_select %p29, 0, %s28
      %s31 = sadd.s32 1, %s20
      %s32 = scalar_select %p29, %s31, %s20
      %p33 = scmp.ge.s32.totalorder %s32, 1
      %s34 = scalar_select %p33, 0, %s32
      %s35 = sadd.s32 1, %s19
      %s36 = scalar_select %p33, %s35, %s19
      %p37 = scmp.ge.s32.totalorder %s36, 4
      %s38 = scalar_select %p37, 0, %s36
      %s39 = ssub.s32 %s19, %s38
      %s40 = ssub.s32 %s21, %s30
      %s41 = sor.u32 %s39, %s40
      %p42 = scmp.eq.s32.totalorder %s41, 0
      %s44 = sadd.s32 %s43, 1
      %s45 = scalar_select %p42, %s43, %s44
      %p48 = pneg %p42
      %p49 = scmp.eq.s32.totalorder %s12, 3
      %p50 = por %p48, %p49
      %p51 = scmp.ne.s32.totalorder %s43, %s46
      %p52 = scmp.eq.s32.totalorder %s12, 0
      %p53 = por %p51, %p52
      %p54 = scmp.ne.s32.totalorder %s43, %s46
      %p55 = scmp.eq.s32.totalorder %s17, 3
      %p56 = por %p54, %p55
      %p57 = scmp.ne.s32.totalorder %s46, %s47
      %p58 = scmp.eq.s32.totalorder %s17, 0
      %p59 = por %p57, %p58
      %p60 = scmp.ne.s32.totalorder %s46, %s47
      %p61 = scmp.eq.s32.totalorder %s18, 3
      %p62 = por %p60, %p61
      %p64 = scmp.ne.s32.totalorder %s47, %s63
      %p65 = scmp.eq.s32.totalorder %s18, 0
      %p66 = por %p64, %p65
      %s67 = ssub.s32 %s21, %s30
      %s68 = ssub.s32 %s20, %s34
      %s69 = sor.u32 %s67, %s68
      %p70 = scmp.eq.s32.totalorder %s69, 0
      %s72 = sadd.s32 %s71, 1
      %s73 = scalar_select %p70, %s71, %s72
      %p76 = pneg %p70
      %p77 = scmp.eq.s32.totalorder %s12, 3
      %p78 = por %p76, %p77
      %p79 = scmp.ne.s32.totalorder %s71, %s74
      %p80 = scmp.eq.s32.totalorder %s12, 0
      %p81 = por %p79, %p80
      %p82 = scmp.ne.s32.totalorder %s71, %s74
      %p83 = scmp.eq.s32.totalorder %s17, 3
      %p84 = por %p82, %p83
      %p85 = scmp.ne.s32.totalorder %s74, %s75
      %p86 = scmp.eq.s32.totalorder %s17, 0
      %p87 = por %p85, %p86
      %p88 = scmp.ne.s32.totalorder %s74, %s75
      %p89 = scmp.eq.s32.totalorder %s18, 3
      %p90 = por %p88, %p89
      %p92 = scmp.ne.s32.totalorder %s75, %s91
      %p93 = scmp.eq.s32.totalorder %s18, 0
      %p94 = por %p92, %p93
      %s95 = ssub.s32 %s20, %s34
      %p96 = scmp.eq.s32.totalorder %s95, 0
      %s98 = sadd.s32 %s97, 1
      %s99 = scalar_select %p96, %s97, %s98
      %p102 = pneg %p96
      %p103 = scmp.eq.s32.totalorder %s12, 3
      %p104 = por %p102, %p103
      %p105 = scmp.ne.s32.totalorder %s97, %s100
      %p106 = scmp.eq.s32.totalorder %s12, 0
      %p107 = por %p105, %p106
      %p108 = scmp.ne.s32.totalorder %s97, %s100
      %p109 = scmp.eq.s32.totalorder %s17, 3
      %p110 = por %p108, %p109
      %p111 = scmp.ne.s32.totalorder %s100, %s101
      %p112 = scmp.eq.s32.totalorder %s17, 0
      %p113 = por %p111, %p112
      %p114 = scmp.ne.s32.totalorder %s100, %s101
      %p115 = scmp.eq.s32.totalorder %s18, 3
      %p116 = por %p114, %p115
      %p118 = scmp.ne.s32.totalorder %s101, %s117
      %p119 = scmp.eq.s32.totalorder %s18, 0
      %p120 = por %p118, %p119
      %s121 = ssub.s32 %s19, %s38
      %s122 = ssub.s32 %s20, %s34
      %s123 = sor.u32 %s121, %s122
      %p124 = scmp.eq.s32.totalorder %s123, 0
      %s126 = sadd.s32 %s125, 1
      %s127 = scalar_select %p124, %s125, %s126
      %p130 = pneg %p124
      %p131 = scmp.eq.s32.totalorder %s12, 3
      %p132 = por %p130, %p131
      %p133 = scmp.ne.s32.totalorder %s125, %s128
      %p134 = scmp.eq.s32.totalorder %s12, 0
      %p135 = por %p133, %p134
      %p136 = scmp.ne.s32.totalorder %s125, %s128
      %p137 = scmp.eq.s32.totalorder %s17, 3
      %p138 = por %p136, %p137
      %p139 = scmp.ne.s32.totalorder %s128, %s129
      %p140 = scmp.eq.s32.totalorder %s17, 0
      %p141 = por %p139, %p140
      %p142 = scmp.ne.s32.totalorder %s128, %s129
      %p143 = scmp.eq.s32.totalorder %s18, 3
      %p144 = por %p142, %p143
      %p146 = scmp.ne.s32.totalorder %s129, %s145
      %p147 = scmp.eq.s32.totalorder %s18, 0
      %p148 = por %p146, %p147
      %p149 = scmp.le.s32.totalorder 1, %s12
      %p150 = scmp.lt.s32.totalorder %s12, 5
      %p151 = pnand %p149, %p150
      %p152 = pneg %p151
      // Predicated region
      $region9: #{_conv_fwd_impl.1} parent=5 // pred_check
        _
      $region10: #{_conv_fwd_impl.1} parent=5 // pred_check_branch
        %154 = sbr.rel (%p151) target = $region12
      $region11: #{_conv_fwd_impl.1} parent=5 // pred_region
        %s155 = ssub.s32 %s12, 1
        // Predicated region
        $region13: #{_conv_fwd_impl.1} parent=11 // pred_check
          %p156 = pneg %p87
        $region14: #{_conv_fwd_impl.1} parent=11 // pred_check_branch
          %158 = sbr.rel (%p156) target = $region16
        $region15: #{_conv_fwd_impl.1} parent=11 // pred_region
          %s159 = smul.u32 4, %s24
          %p160 = scmp.lt.s32.totalorder %s159, 3
          %s161 = scalar_select %p160, %s159, 3
          %p162 = scmp.lt.s32.totalorder %s23, 0
          %s163 = scalar_select %p162, %s23, 0
          %s164 = sadd.s32 %s163, %s161
          %s165 = smul.addr %s164, 4
          %s166 = scalar_lea.vmem %s1, %s165
          %s167 = smul.u32 4, %s24
        $region16: #{_conv_fwd_impl.1} parent=11 // pred_fallthru
          _
        // Predicated region
        $region17: #{_conv_fwd_impl.1} parent=11 // pred_check
          %p168 = pneg %p113
        $region18: #{_conv_fwd_impl.1} parent=11 // pred_check_branch
          %170 = sbr.rel (%p168) target = $region20
        $region19: #{_conv_fwd_impl.1} parent=11 // pred_region
          %p171 = scmp.lt.s32.totalorder %s23, 0
          %s172 = scalar_select %p171, %s23, 0
          %s173 = scalar_lea.vmem %s2, %s172
        $region20: #{_conv_fwd_impl.1} parent=11 // pred_fallthru
          _
      $region12: #{_conv_fwd_impl.1} parent=5 // pred_fallthru
        _
      %p174 = scmp.lt.s32.totalorder %s12, 4
      // Predicated region
      $region21: #{_conv_fwd_impl.1} parent=5 // pred_check
        %p175 = pneg %p174
      $region22: #{_conv_fwd_impl.1} parent=5 // pred_check_branch
        %177 = sbr.rel (%p175) target = $region24
      $region23: #{_conv_fwd_impl.1} parent=5 // pred_region
        // Predicated region
        $region25: #{_conv_fwd_impl.1} parent=23 // pred_check
          %p178 = pneg %p53
        $region26: #{_conv_fwd_impl.1} parent=23 // pred_check_branch
          %180 = sbr.rel (%p178) target = $region28
        $region27: #{_conv_fwd_impl.1} parent=23 // pred_region
          %s181 = smul.u32 64, %s19
          %p182 = scmp.lt.s32.totalorder %s181, 255
          %s183 = scalar_select %p182, %s181, 255
          %p184 = scmp.lt.s32.totalorder %s21, 0
          %s185 = scalar_select %p184, %s21, 0
          %s186 = sadd.s32 %s185, %s183
          %s187 = smul.addr %s186, 4
          %s188 = scalar_lea.vmem %s0, %s187
          %s189 = smul.u32 64, %s19
        $region28: #{_conv_fwd_impl.1} parent=23 // pred_fallthru
          _
      $region24: #{_conv_fwd_impl.1} parent=5 // pred_fallthru
        _
      %p190 = scmp.le.s32.totalorder 1, %s12
      %p191 = scmp.lt.s32.totalorder %s12, 5
      %p192 = pnand %p190, %p191
      %p193 = pneg %p192
      // Predicated region
      $region29: #{_conv_fwd_impl.1} parent=5 // pred_check
        _
      $region30: #{_conv_fwd_impl.1} parent=5 // pred_check_branch
        %195 = sbr.rel (%p192) target = $region32
      $region31: #{_conv_fwd_impl.1} parent=5 // pred_region
        %s196 = ssub.s32 %s12, 1
        %s197 = smul.u32 64, %s22
        %p198 = scmp.lt.s32.totalorder %s197, 255
        %s199 = scalar_select %p198, %s197, 255
        %p200 = scmp.lt.s32.totalorder %s24, 0
        %s201 = scalar_select %p200, %s24, 0
        %s202 = sadd.s32 %s201, %s199
        %s203 = smul.addr %s202, 4
        %s204 = scalar_lea.vmem %s0, %s203
        %p205 = pneg %p59
        %p206 = pneg %p56
        %s207 = smul.u32 4, %s24
        %p208 = scmp.lt.s32.totalorder %s207, 3
        %s209 = scalar_select %p208, %s207, 3
        %p210 = scmp.lt.s32.totalorder %s23, 0
        %s211 = scalar_select %p210, %s23, 0
        %s212 = sadd.s32 %s211, %s209
        %s213 = smul.addr %s212, 4
        %s214 = scalar_lea.vmem %s1, %s213
        %p215 = pneg %p87
        %p216 = pneg %p84
        %p217 = scmp.lt.s32.totalorder %s23, 0
        %s218 = scalar_select %p217, %s23, 0
        %s219 = scalar_lea.vmem %s2, %s218
        %p220 = pneg %p113
        %p221 = pneg %p110
        %p222 = pneg %p141
        %p223 = pneg %p138
        %s224 = sand.u32 %s128, 1
        %s225 = scalar_lea.sflag [#allocation4], %s224
        %s226 = sand.u32 %s128, 1
        %s227 = smul.addr %s226, 512
        %s228 = scalar_lea.vmem [#allocation3], %s227
        %s229 = smul.u32 64, %s22
        %p230 = scmp.lt.s32.totalorder %s229, 255
        %s231 = scalar_select %p230, %s229, 255
        %p232 = scmp.lt.s32.totalorder %s24, 0
        %s233 = scalar_select %p232, %s24, 0
        %s234 = sadd.s32 %s233, %s231
        %s235 = smul.addr %s234, 4
        %s236 = scalar_lea.vmem %s0, %s235
        %s237 = smul.u32 64, %s22
        %s238 = smul.u32 4, %s24
        %p239 = scmp.lt.s32.totalorder %s238, 3
        %s240 = scalar_select %p239, %s238, 3
        %p241 = scmp.lt.s32.totalorder %s23, 0
        %s242 = scalar_select %p241, %s23, 0
        %s243 = sadd.s32 %s242, %s240
        %s244 = smul.addr %s243, 4
        %s245 = scalar_lea.vmem %s1, %s244
        %s246 = smul.u32 4, %s24
        %p247 = scmp.lt.s32.totalorder %s23, 0
        %s248 = scalar_select %p247, %s23, 0
        %s249 = scalar_lea.vmem %s2, %s248
        %s250 = smul.u32 64, %s22
        %p252 = scmp.eq.s32.totalorder %s24, 0
        // Predicated region
        $region33: #{_conv_fwd_impl.1} parent=31 // pred_check
          %p253 = pneg %p252
        $region34: #{_conv_fwd_impl.1} parent=31 // pred_check_branch
          %255 = sbr.rel (%p253) target = $region36
        $region35: #{_conv_fwd_impl.1} parent=31 // pred_region
          %vm256 = vcmask 523264
          %257 = vst.msk [vmem:[#allocation2] sm:$0xff] %vm256, 0.0
          %258 = vst.msk [vmem:[#allocation2 + $0x8] sm:$0xff] %vm256, 0.0
          %259 = vst.msk [vmem:[#allocation2 + $0x10] sm:$0xff] %vm256, 0.0
          %260 = vst.msk [vmem:[#allocation2 + $0x18] sm:$0xff] %vm256, 0.0
          %261 = vst.msk [vmem:[#allocation2 + $0x20] sm:$0xff] %vm256, 0.0
          %262 = vst.msk [vmem:[#allocation2 + $0x28] sm:$0xff] %vm256, 0.0
          %263 = vst.msk [vmem:[#allocation2 + $0x30] sm:$0xff] %vm256, 0.0
          %264 = vst.msk [vmem:[#allocation2 + $0x38] sm:$0xff] %vm256, 0.0
          %265 = vst.msk [vmem:[#allocation2 + $0x40] sm:$0xff] %vm256, 0.0
          %266 = vst.msk [vmem:[#allocation2 + $0x48] sm:$0xff] %vm256, 0.0
          %267 = vst.msk [vmem:[#allocation2 + $0x50] sm:$0xff] %vm256, 0.0
          %268 = vst.msk [vmem:[#allocation2 + $0x58] sm:$0xff] %vm256, 0.0
          %269 = vst.msk [vmem:[#allocation2 + $0x60] sm:$0xff] %vm256, 0.0
          %270 = vst.msk [vmem:[#allocation2 + $0x68] sm:$0xff] %vm256, 0.0
          %271 = vst.msk [vmem:[#allocation2 + $0x70] sm:$0xff] %vm256, 0.0
          %272 = vst.msk [vmem:[#allocation2 + $0x78] sm:$0xff] %vm256, 0.0
          %273 = vst.msk [vmem:[#allocation2 + $0x80] sm:$0xff] %vm256, 0.0
          %274 = vst.msk [vmem:[#allocation2 + $0x88] sm:$0xff] %vm256, 0.0
          %275 = vst.msk [vmem:[#allocation2 + $0x90] sm:$0xff] %vm256, 0.0
          %276 = vst.msk [vmem:[#allocation2 + $0x98] sm:$0xff] %vm256, 0.0
          %277 = vst.msk [vmem:[#allocation2 + $0xa0] sm:$0xff] %vm256, 0.0
          %278 = vst.msk [vmem:[#allocation2 + $0xa8] sm:$0xff] %vm256, 0.0
          %279 = vst.msk [vmem:[#allocation2 + $0xb0] sm:$0xff] %vm256, 0.0
          %280 = vst.msk [vmem:[#allocation2 + $0xb8] sm:$0xff] %vm256, 0.0
          %281 = vst.msk [vmem:[#allocation2 + $0xc0] sm:$0xff] %vm256, 0.0
          %282 = vst.msk [vmem:[#allocation2 + $0xc8] sm:$0xff] %vm256, 0.0
          %283 = vst.msk [vmem:[#allocation2 + $0xd0] sm:$0xff] %vm256, 0.0
          %284 = vst.msk [vmem:[#allocation2 + $0xd8] sm:$0xff] %vm256, 0.0
          %285 = vst.msk [vmem:[#allocation2 + $0xe0] sm:$0xff] %vm256, 0.0
          %286 = vst.msk [vmem:[#allocation2 + $0xe8] sm:$0xff] %vm256, 0.0
          %287 = vst.msk [vmem:[#allocation2 + $0xf0] sm:$0xff] %vm256, 0.0
          %288 = vst.msk [vmem:[#allocation2 + $0xf8] sm:$0xff] %vm256, 0.0
          %289 = vst.msk [vmem:[#allocation2 + $0x100] sm:$0xff] %vm256, 0.0
          %290 = vst.msk [vmem:[#allocation2 + $0x108] sm:$0xff] %vm256, 0.0
          %291 = vst.msk [vmem:[#allocation2 + $0x110] sm:$0xff] %vm256, 0.0
          %292 = vst.msk [vmem:[#allocation2 + $0x118] sm:$0xff] %vm256, 0.0
          %293 = vst.msk [vmem:[#allocation2 + $0x120] sm:$0xff] %vm256, 0.0
          %294 = vst.msk [vmem:[#allocation2 + $0x128] sm:$0xff] %vm256, 0.0
          %295 = vst.msk [vmem:[#allocation2 + $0x130] sm:$0xff] %vm256, 0.0
          %296 = vst.msk [vmem:[#allocation2 + $0x138] sm:$0xff] %vm256, 0.0
          %297 = vst.msk [vmem:[#allocation2 + $0x140] sm:$0xff] %vm256, 0.0
          %298 = vst.msk [vmem:[#allocation2 + $0x148] sm:$0xff] %vm256, 0.0
          %299 = vst.msk [vmem:[#allocation2 + $0x150] sm:$0xff] %vm256, 0.0
          %300 = vst.msk [vmem:[#allocation2 + $0x158] sm:$0xff] %vm256, 0.0
          %301 = vst.msk [vmem:[#allocation2 + $0x160] sm:$0xff] %vm256, 0.0
          %302 = vst.msk [vmem:[#allocation2 + $0x168] sm:$0xff] %vm256, 0.0
          %303 = vst.msk [vmem:[#allocation2 + $0x170] sm:$0xff] %vm256, 0.0
          %304 = vst.msk [vmem:[#allocation2 + $0x178] sm:$0xff] %vm256, 0.0
          %305 = vst.msk [vmem:[#allocation2 + $0x180] sm:$0xff] %vm256, 0.0
          %306 = vst.msk [vmem:[#allocation2 + $0x188] sm:$0xff] %vm256, 0.0
          %307 = vst.msk [vmem:[#allocation2 + $0x190] sm:$0xff] %vm256, 0.0
          %308 = vst.msk [vmem:[#allocation2 + $0x198] sm:$0xff] %vm256, 0.0
          %309 = vst.msk [vmem:[#allocation2 + $0x1a0] sm:$0xff] %vm256, 0.0
          %310 = vst.msk [vmem:[#allocation2 + $0x1a8] sm:$0xff] %vm256, 0.0
          %311 = vst.msk [vmem:[#allocation2 + $0x1b0] sm:$0xff] %vm256, 0.0
          %312 = vst.msk [vmem:[#allocation2 + $0x1b8] sm:$0xff] %vm256, 0.0
          %313 = vst.msk [vmem:[#allocation2 + $0x1c0] sm:$0xff] %vm256, 0.0
          %314 = vst.msk [vmem:[#allocation2 + $0x1c8] sm:$0xff] %vm256, 0.0
          %315 = vst.msk [vmem:[#allocation2 + $0x1d0] sm:$0xff] %vm256, 0.0
          %316 = vst.msk [vmem:[#allocation2 + $0x1d8] sm:$0xff] %vm256, 0.0
          %317 = vst.msk [vmem:[#allocation2 + $0x1e0] sm:$0xff] %vm256, 0.0
          %318 = vst.msk [vmem:[#allocation2 + $0x1e8] sm:$0xff] %vm256, 0.0
          %319 = vst.msk [vmem:[#allocation2 + $0x1f0] sm:$0xff] %vm256, 0.0
          %320 = vst.msk [vmem:[#allocation2 + $0x1f8] sm:$0xff] %vm256, 0.0
        $region36: #{_conv_fwd_impl.1} parent=31 // pred_fallthru
          _
        %v321 = vld [vmem:[%s236] sm:$0xf]
        %v322 = vld [vmem:[%s236 + $0x4] sm:$0xf]
        %v323 = vld [vmem:[%s236 + $0x8] sm:$0xf]
        %v324 = vld [vmem:[%s236 + $0xc] sm:$0xf]
        %v325 = vld [vmem:[%s236 + $0x10] sm:$0xf]
        %v326 = vld [vmem:[%s236 + $0x14] sm:$0xf]
        %v327 = vld [vmem:[%s236 + $0x18] sm:$0xf]
        %v328 = vld [vmem:[%s236 + $0x1c] sm:$0xf]
        %v329 = vld [vmem:[%s236 + $0x20] sm:$0xf]
        %v330 = vld [vmem:[%s236 + $0x24] sm:$0xf]
        %v331 = vld [vmem:[%s236 + $0x28] sm:$0xf]
        %v332 = vld [vmem:[%s236 + $0x2c] sm:$0xf]
        %v333 = vld [vmem:[%s236 + $0x30] sm:$0xf]
        %v334 = vld [vmem:[%s236 + $0x34] sm:$0xf]
        %v335 = vld [vmem:[%s236 + $0x38] sm:$0xf]
        %v336 = vld [vmem:[%s236 + $0x3c] sm:$0xf]
        %v337 = vld [vmem:[%s236 + $0x40] sm:$0xf]
        %v338 = vld [vmem:[%s236 + $0x44] sm:$0xf]
        %v339 = vld [vmem:[%s236 + $0x48] sm:$0xf]
        %v340 = vld [vmem:[%s236 + $0x4c] sm:$0xf]
        %v341 = vld [vmem:[%s236 + $0x50] sm:$0xf]
        %v342 = vld [vmem:[%s236 + $0x54] sm:$0xf]
        %v343 = vld [vmem:[%s236 + $0x58] sm:$0xf]
        %v344 = vld [vmem:[%s236 + $0x5c] sm:$0xf]
        %v345 = vld [vmem:[%s236 + $0x60] sm:$0xf]
        %v346 = vld [vmem:[%s236 + $0x64] sm:$0xf]
        %v347 = vld [vmem:[%s236 + $0x68] sm:$0xf]
        %v348 = vld [vmem:[%s236 + $0x6c] sm:$0xf]
        %v349 = vld [vmem:[%s236 + $0x70] sm:$0xf]
        %v350 = vld [vmem:[%s236 + $0x74] sm:$0xf]
        %v351 = vld [vmem:[%s236 + $0x78] sm:$0xf]
        %v352 = vld [vmem:[%s236 + $0x7c] sm:$0xf]
        %v353 = vld [vmem:[%s236 + $0x80] sm:$0xf]
        %v354 = vld [vmem:[%s236 + $0x84] sm:$0xf]
        %v355 = vld [vmem:[%s236 + $0x88] sm:$0xf]
        %v356 = vld [vmem:[%s236 + $0x8c] sm:$0xf]
        %v357 = vld [vmem:[%s236 + $0x90] sm:$0xf]
        %v358 = vld [vmem:[%s236 + $0x94] sm:$0xf]
        %v359 = vld [vmem:[%s236 + $0x98] sm:$0xf]
        %v360 = vld [vmem:[%s236 + $0x9c] sm:$0xf]
        %v361 = vld [vmem:[%s236 + $0xa0] sm:$0xf]
        %v362 = vld [vmem:[%s236 + $0xa4] sm:$0xf]
        %v363 = vld [vmem:[%s236 + $0xa8] sm:$0xf]
        %v364 = vld [vmem:[%s236 + $0xac] sm:$0xf]
        %v365 = vld [vmem:[%s236 + $0xb0] sm:$0xf]
        %v366 = vld [vmem:[%s236 + $0xb4] sm:$0xf]
        %v367 = vld [vmem:[%s236 + $0xb8] sm:$0xf]
        %v368 = vld [vmem:[%s236 + $0xbc] sm:$0xf]
        %v369 = vld [vmem:[%s236 + $0xc0] sm:$0xf]
        %v370 = vld [vmem:[%s236 + $0xc4] sm:$0xf]
        %v371 = vld [vmem:[%s236 + $0xc8] sm:$0xf]
        %v372 = vld [vmem:[%s236 + $0xcc] sm:$0xf]
        %v373 = vld [vmem:[%s236 + $0xd0] sm:$0xf]
        %v374 = vld [vmem:[%s236 + $0xd4] sm:$0xf]
        %v375 = vld [vmem:[%s236 + $0xd8] sm:$0xf]
        %v376 = vld [vmem:[%s236 + $0xdc] sm:$0xf]
        %v377 = vld [vmem:[%s236 + $0xe0] sm:$0xf]
        %v378 = vld [vmem:[%s236 + $0xe4] sm:$0xf]
        %v379 = vld [vmem:[%s236 + $0xe8] sm:$0xf]
        %v380 = vld [vmem:[%s236 + $0xec] sm:$0xf]
        %v381 = vld [vmem:[%s236 + $0xf0] sm:$0xf]
        %v382 = vld [vmem:[%s236 + $0xf4] sm:$0xf]
        %v383 = vld [vmem:[%s236 + $0xf8] sm:$0xf]
        %v384 = vld [vmem:[%s236 + $0xfc] sm:$0xf]
        %v385 = vld [vmem:[#allocation2] sm:$0xff]
        %v386 = vld [vmem:[#allocation2 + $0x8] sm:$0xff]
        %v387 = vld [vmem:[#allocation2 + $0x10] sm:$0xff]
        %v388 = vld [vmem:[#allocation2 + $0x18] sm:$0xff]
        %v389 = vld [vmem:[#allocation2 + $0x20] sm:$0xff]
        %v390 = vld [vmem:[#allocation2 + $0x28] sm:$0xff]
        %v391 = vld [vmem:[#allocation2 + $0x30] sm:$0xff]
        %v392 = vld [vmem:[#allocation2 + $0x38] sm:$0xff]
        %v393 = vld [vmem:[#allocation2 + $0x40] sm:$0xff]
        %v394 = vld [vmem:[#allocation2 + $0x48] sm:$0xff]
        %v395 = vld [vmem:[#allocation2 + $0x50] sm:$0xff]
        %v396 = vld [vmem:[#allocation2 + $0x58] sm:$0xff]
        %v397 = vld [vmem:[#allocation2 + $0x60] sm:$0xff]
        %v398 = vld [vmem:[#allocation2 + $0x68] sm:$0xff]
        %v399 = vld [vmem:[#allocation2 + $0x70] sm:$0xff]
        %v400 = vld [vmem:[#allocation2 + $0x78] sm:$0xff]
        %v401 = vld [vmem:[#allocation2 + $0x80] sm:$0xff]
        %v402 = vld [vmem:[#allocation2 + $0x88] sm:$0xff]
        %v403 = vld [vmem:[#allocation2 + $0x90] sm:$0xff]
        %v404 = vld [vmem:[#allocation2 + $0x98] sm:$0xff]
        %v405 = vld [vmem:[#allocation2 + $0xa0] sm:$0xff]
        %v406 = vld [vmem:[#allocation2 + $0xa8] sm:$0xff]
        %v407 = vld [vmem:[#allocation2 + $0xb0] sm:$0xff]
        %v408 = vld [vmem:[#allocation2 + $0xb8] sm:$0xff]
        %v409 = vld [vmem:[#allocation2 + $0xc0] sm:$0xff]
        %v410 = vld [vmem:[#allocation2 + $0xc8] sm:$0xff]
        %v411 = vld [vmem:[#allocation2 + $0xd0] sm:$0xff]
        %v412 = vld [vmem:[#allocation2 + $0xd8] sm:$0xff]
        %v413 = vld [vmem:[#allocation2 + $0xe0] sm:$0xff]
        %v414 = vld [vmem:[#allocation2 + $0xe8] sm:$0xff]
        %v415 = vld [vmem:[#allocation2 + $0xf0] sm:$0xff]
        %v416 = vld [vmem:[#allocation2 + $0xf8] sm:$0xff]
        %v417 = vld [vmem:[#allocation2 + $0x100] sm:$0xff]
        %v418 = vld [vmem:[#allocation2 + $0x108] sm:$0xff]
        %v419 = vld [vmem:[#allocation2 + $0x110] sm:$0xff]
        %v420 = vld [vmem:[#allocation2 + $0x118] sm:$0xff]
        %v421 = vld [vmem:[#allocation2 + $0x120] sm:$0xff]
        %v422 = vld [vmem:[#allocation2 + $0x128] sm:$0xff]
        %v423 = vld [vmem:[#allocation2 + $0x130] sm:$0xff]
        %v424 = vld [vmem:[#allocation2 + $0x138] sm:$0xff]
        %v425 = vld [vmem:[#allocation2 + $0x140] sm:$0xff]
        %v426 = vld [vmem:[#allocation2 + $0x148] sm:$0xff]
        %v427 = vld [vmem:[#allocation2 + $0x150] sm:$0xff]
        %v428 = vld [vmem:[#allocation2 + $0x158] sm:$0xff]
        %v429 = vld [vmem:[#allocation2 + $0x160] sm:$0xff]
        %v430 = vld [vmem:[#allocation2 + $0x168] sm:$0xff]
        %v431 = vld [vmem:[#allocation2 + $0x170] sm:$0xff]
        %v432 = vld [vmem:[#allocation2 + $0x178] sm:$0xff]
        %v433 = vld [vmem:[#allocation2 + $0x180] sm:$0xff]
        %v434 = vld [vmem:[#allocation2 + $0x188] sm:$0xff]
        %v435 = vld [vmem:[#allocation2 + $0x190] sm:$0xff]
        %v436 = vld [vmem:[#allocation2 + $0x198] sm:$0xff]
        %v437 = vld [vmem:[#allocation2 + $0x1a0] sm:$0xff]
        %v438 = vld [vmem:[#allocation2 + $0x1a8] sm:$0xff]
        %v439 = vld [vmem:[#allocation2 + $0x1b0] sm:$0xff]
        %v440 = vld [vmem:[#allocation2 + $0x1b8] sm:$0xff]
        %v441 = vld [vmem:[#allocation2 + $0x1c0] sm:$0xff]
        %v442 = vld [vmem:[#allocation2 + $0x1c8] sm:$0xff]
        %v443 = vld [vmem:[#allocation2 + $0x1d0] sm:$0xff]
        %v444 = vld [vmem:[#allocation2 + $0x1d8] sm:$0xff]
        %v445 = vld [vmem:[#allocation2 + $0x1e0] sm:$0xff]
        %v446 = vld [vmem:[#allocation2 + $0x1e8] sm:$0xff]
        %v447 = vld [vmem:[#allocation2 + $0x1f0] sm:$0xff]
        %v448 = vld [vmem:[#allocation2 + $0x1f8] sm:$0xff]
        %v449 = vld [vmem:[%s245] sm:$0xf]
        %v450 = vld [vmem:[%s245 + $0x4] sm:$0xf]
        %v451 = vld [vmem:[%s245 + $0x8] sm:$0xf]
        %v452 = vld [vmem:[%s245 + $0xc] sm:$0x3]
        %v517 = vunpack.c.l.b16 %v321
        %v518 = vunpack.c.l.b16 %v322
        %v519 = vunpack.c.l.b16 %v323
        %v520 = vunpack.c.l.b16 %v324
        %v521 = vunpack.c.l.b16 %v325
        %v522 = vunpack.c.l.b16 %v326
        %v523 = vunpack.c.l.b16 %v327
        %v524 = vunpack.c.l.b16 %v328
        %v525 = vunpack.c.l.b16 %v329
        %v526 = vunpack.c.l.b16 %v330
        %v527 = vunpack.c.l.b16 %v331
        %v528 = vunpack.c.l.b16 %v332
        %v529 = vunpack.c.l.b16 %v333
        %v530 = vunpack.c.l.b16 %v334
        %v531 = vunpack.c.l.b16 %v335
        %v532 = vunpack.c.l.b16 %v336
        %v533 = vunpack.c.l.b16 %v337
        %v534 = vunpack.c.l.b16 %v338
        %v535 = vunpack.c.l.b16 %v339
        %v536 = vunpack.c.l.b16 %v340
        %v537 = vunpack.c.l.b16 %v341
        %v538 = vunpack.c.l.b16 %v342
        %v539 = vunpack.c.l.b16 %v343
        %v540 = vunpack.c.l.b16 %v344
        %v541 = vunpack.c.l.b16 %v345
        %v542 = vunpack.c.l.b16 %v346
        %v543 = vunpack.c.l.b16 %v347
        %v544 = vunpack.c.l.b16 %v348
        %v545 = vunpack.c.l.b16 %v349
        %v546 = vunpack.c.l.b16 %v350
        %v547 = vunpack.c.l.b16 %v351
        %v548 = vunpack.c.l.b16 %v352
        %v549 = vunpack.c.l.b16 %v353
        %v550 = vunpack.c.l.b16 %v354
        %v551 = vunpack.c.l.b16 %v355
        %v552 = vunpack.c.l.b16 %v356
        %v553 = vunpack.c.l.b16 %v357
        %v554 = vunpack.c.l.b16 %v358
        %v555 = vunpack.c.l.b16 %v359
        %v556 = vunpack.c.l.b16 %v360
        %v557 = vunpack.c.l.b16 %v361
        %v558 = vunpack.c.l.b16 %v362
        %v559 = vunpack.c.l.b16 %v363
        %v560 = vunpack.c.l.b16 %v364
        %v561 = vunpack.c.l.b16 %v365
        %v562 = vunpack.c.l.b16 %v366
        %v563 = vunpack.c.l.b16 %v367
        %v564 = vunpack.c.l.b16 %v368
        %v565 = vunpack.c.l.b16 %v369
        %v566 = vunpack.c.l.b16 %v370
        %v567 = vunpack.c.l.b16 %v371
        %v568 = vunpack.c.l.b16 %v372
        %v569 = vunpack.c.l.b16 %v373
        %v570 = vunpack.c.l.b16 %v374
        %v571 = vunpack.c.l.b16 %v375
        %v572 = vunpack.c.l.b16 %v376
        %v573 = vunpack.c.l.b16 %v377
        %v574 = vunpack.c.l.b16 %v378
        %v575 = vunpack.c.l.b16 %v379
        %v576 = vunpack.c.l.b16 %v380
        %v577 = vunpack.c.l.b16 %v381
        %v578 = vunpack.c.l.b16 %v382
        %v579 = vunpack.c.l.b16 %v383
        %v580 = vunpack.c.l.b16 %v384
        %v581 = vpack.c.b16 %v518, %v517
        %v582 = vpack.c.b16 %v520, %v519
        %v583 = vpack.c.b16 %v522, %v521
        %v584 = vpack.c.b16 %v524, %v523
        %v585 = vpack.c.b16 %v526, %v525
        %v586 = vpack.c.b16 %v528, %v527
        %v587 = vpack.c.b16 %v530, %v529
        %v588 = vpack.c.b16 %v532, %v531
        %v589 = vpack.c.b16 %v534, %v533
        %v590 = vpack.c.b16 %v536, %v535
        %v591 = vpack.c.b16 %v538, %v537
        %v592 = vpack.c.b16 %v540, %v539
        %v593 = vpack.c.b16 %v542, %v541
        %v594 = vpack.c.b16 %v544, %v543
        %v595 = vpack.c.b16 %v546, %v545
        %v596 = vpack.c.b16 %v548, %v547
        %v597 = vpack.c.b16 %v550, %v549
        %v598 = vpack.c.b16 %v552, %v551
        %v599 = vpack.c.b16 %v554, %v553
        %v600 = vpack.c.b16 %v556, %v555
        %v601 = vpack.c.b16 %v558, %v557
        %v602 = vpack.c.b16 %v560, %v559
        %v603 = vpack.c.b16 %v562, %v561
        %v604 = vpack.c.b16 %v564, %v563
        %v605 = vpack.c.b16 %v566, %v565
        %v606 = vpack.c.b16 %v568, %v567
        %v607 = vpack.c.b16 %v570, %v569
        %v608 = vpack.c.b16 %v572, %v571
        %v609 = vpack.c.b16 %v574, %v573
        %v610 = vpack.c.b16 %v576, %v575
        %v611 = vpack.c.b16 %v578, %v577
        %v612 = vpack.c.b16 %v580, %v579
        %v617 = vunpack.c.l.b16 %v449
        %v618 = vunpack.c.l.b16 %v450
        %v619 = vunpack.c.l.b16 %v451
        %v620 = vunpack.c.l.b16 %v452
        %v621 = vpack.c.b16 %v618, %v617
        %v622 = vpack.c.b16 %v620, %v619
        %vm624 = vcmask 220160
        %v626 = vsel %vm624, %v581, 0
        %v629 = vsel %vm624, %v582, 0
        %v632 = vsel %vm624, %v583, 0
        %v635 = vsel %vm624, %v584, 0
        %v638 = vsel %vm624, %v585, 0
        %v641 = vsel %vm624, %v586, 0
        %v644 = vsel %vm624, %v587, 0
        %v647 = vsel %vm624, %v588, 0
        %v650 = vsel %vm624, %v589, 0
        %v653 = vsel %vm624, %v590, 0
        %v656 = vsel %vm624, %v591, 0
        %v659 = vsel %vm624, %v592, 0
        %v662 = vsel %vm624, %v593, 0
        %v665 = vsel %vm624, %v594, 0
        %v668 = vsel %vm624, %v595, 0
        %v671 = vsel %vm624, %v596, 0
        %v674 = vsel %vm624, %v597, 0
        %v677 = vsel %vm624, %v598, 0
        %v680 = vsel %vm624, %v599, 0
        %v683 = vsel %vm624, %v600, 0
        %v686 = vsel %vm624, %v601, 0
        %v689 = vsel %vm624, %v602, 0
        %v692 = vsel %vm624, %v603, 0
        %v695 = vsel %vm624, %v604, 0
        %v698 = vsel %vm624, %v605, 0
        %v701 = vsel %vm624, %v606, 0
        %v704 = vsel %vm624, %v607, 0
        %v707 = vsel %vm624, %v608, 0
        %v710 = vsel %vm624, %v609, 0
        %v713 = vsel %vm624, %v610, 0
        %v716 = vsel %vm624, %v611, 0
        %v719 = vsel %vm624, %v612, 0
        %vm721 = vcmask 1044480
        %vm722 = vcmask 1045504
        %v723 = vsel %vm721, 4294967295, 65535
        %v724 = vsel %vm722, %v723, 0
        %v726 = vand.u32 %v622, %v724
        %728 = vmatpush.bf16.msra.mxu0 0
        %729 = vmatpush.bf16.msra.mxu0 0
        %730 = vmatpush.bf16.msra.mxu0 0
        %731 = vmatpush.bf16.msra.mxu0 0
        %732 = vmatpush.bf16.msra.mxu0 0
        %733 = vmatpush.bf16.msra.mxu0 0
        %734 = vmatpush.bf16.msra.mxu0 %v726
        %735 = vmatpush.bf16.msra.mxu0 %v621
        %736 = vmatmul.bf16.gmra.mxu0 %v626
        %v737 = vpop.f32.mrf.mxu0
        %v738 = vadd.f32 0.0, %v737
        %v739 = vpop.f32.mrf.mxu0
        %v740 = vadd.f32 0.0, %v739
        %741 = vmatmul.bf16.gmra.mxu0 %v629
        %v742 = vpop.f32.mrf.mxu0
        %v743 = vadd.f32 0.0, %v742
        %v744 = vpop.f32.mrf.mxu0
        %v745 = vadd.f32 0.0, %v744
        %746 = vmatmul.bf16.gmra.mxu0 %v632
        %v747 = vpop.f32.mrf.mxu0
        %v748 = vadd.f32 0.0, %v747
        %v749 = vpop.f32.mrf.mxu0
        %v750 = vadd.f32 0.0, %v749
        %751 = vmatmul.bf16.gmra.mxu0 %v635
        %v752 = vpop.f32.mrf.mxu0
        %v753 = vadd.f32 0.0, %v752
        %v754 = vpop.f32.mrf.mxu0
        %v755 = vadd.f32 0.0, %v754
        %756 = vmatmul.bf16.gmra.mxu0 %v638
        %v757 = vpop.f32.mrf.mxu0
        %v758 = vadd.f32 0.0, %v757
        %v759 = vpop.f32.mrf.mxu0
        %v760 = vadd.f32 0.0, %v759
        %761 = vmatmul.bf16.gmra.mxu0 %v641
        %v762 = vpop.f32.mrf.mxu0
        %v763 = vadd.f32 0.0, %v762
        %v764 = vpop.f32.mrf.mxu0
        %v765 = vadd.f32 0.0, %v764
        %766 = vmatmul.bf16.gmra.mxu0 %v644
        %v767 = vpop.f32.mrf.mxu0
        %v768 = vadd.f32 0.0, %v767
        %v769 = vpop.f32.mrf.mxu0
        %v770 = vadd.f32 0.0, %v769
        %771 = vmatmul.bf16.gmra.mxu0 %v647
        %v772 = vpop.f32.mrf.mxu0
        %v773 = vadd.f32 0.0, %v772
        %v774 = vpop.f32.mrf.mxu0
        %v775 = vadd.f32 0.0, %v774
        %776 = vmatmul.bf16.gmra.mxu0 %v650
        %v777 = vpop.f32.mrf.mxu0
        %v778 = vadd.f32 0.0, %v777
        %v779 = vpop.f32.mrf.mxu0
        %v780 = vadd.f32 0.0, %v779
        %781 = vmatmul.bf16.gmra.mxu0 %v653
        %v782 = vpop.f32.mrf.mxu0
        %v783 = vadd.f32 0.0, %v782
        %v784 = vpop.f32.mrf.mxu0
        %v785 = vadd.f32 0.0, %v784
        %786 = vmatmul.bf16.gmra.mxu0 %v656
        %v787 = vpop.f32.mrf.mxu0
        %v788 = vadd.f32 0.0, %v787
        %v789 = vpop.f32.mrf.mxu0
        %v790 = vadd.f32 0.0, %v789
        %791 = vmatmul.bf16.gmra.mxu0 %v659
        %v792 = vpop.f32.mrf.mxu0
        %v793 = vadd.f32 0.0, %v792
        %v794 = vpop.f32.mrf.mxu0
        %v795 = vadd.f32 0.0, %v794
        %796 = vmatmul.bf16.gmra.mxu0 %v662
        %v797 = vpop.f32.mrf.mxu0
        %v798 = vadd.f32 0.0, %v797
        %v799 = vpop.f32.mrf.mxu0
        %v800 = vadd.f32 0.0, %v799
        %801 = vmatmul.bf16.gmra.mxu0 %v665
        %v802 = vpop.f32.mrf.mxu0
        %v803 = vadd.f32 0.0, %v802
        %v804 = vpop.f32.mrf.mxu0
        %v805 = vadd.f32 0.0, %v804
        %806 = vmatmul.bf16.gmra.mxu0 %v668
        %v807 = vpop.f32.mrf.mxu0
        %v808 = vadd.f32 0.0, %v807
        %v809 = vpop.f32.mrf.mxu0
        %v810 = vadd.f32 0.0, %v809
        %811 = vmatmul.bf16.gmra.mxu0 %v671
        %v812 = vpop.f32.mrf.mxu0
        %v813 = vadd.f32 0.0, %v812
        %v814 = vpop.f32.mrf.mxu0
        %v815 = vadd.f32 0.0, %v814
        %816 = vmatmul.bf16.gmra.mxu0 %v674
        %v817 = vpop.f32.mrf.mxu0
        %v818 = vadd.f32 0.0, %v817
        %v819 = vpop.f32.mrf.mxu0
        %v820 = vadd.f32 0.0, %v819
        %821 = vmatmul.bf16.gmra.mxu0 %v677
        %v822 = vpop.f32.mrf.mxu0
        %v823 = vadd.f32 0.0, %v822
        %v824 = vpop.f32.mrf.mxu0
        %v825 = vadd.f32 0.0, %v824
        %826 = vmatmul.bf16.gmra.mxu0 %v680
        %v827 = vpop.f32.mrf.mxu0
        %v828 = vadd.f32 0.0, %v827
        %v829 = vpop.f32.mrf.mxu0
        %v830 = vadd.f32 0.0, %v829
        %831 = vmatmul.bf16.gmra.mxu0 %v683
        %v832 = vpop.f32.mrf.mxu0
        %v833 = vadd.f32 0.0, %v832
        %v834 = vpop.f32.mrf.mxu0
        %v835 = vadd.f32 0.0, %v834
        %836 = vmatmul.bf16.gmra.mxu0 %v686
        %v837 = vpop.f32.mrf.mxu0
        %v838 = vadd.f32 0.0, %v837
        %v839 = vpop.f32.mrf.mxu0
        %v840 = vadd.f32 0.0, %v839
        %841 = vmatmul.bf16.gmra.mxu0 %v689
        %v842 = vpop.f32.mrf.mxu0
        %v843 = vadd.f32 0.0, %v842
        %v844 = vpop.f32.mrf.mxu0
        %v845 = vadd.f32 0.0, %v844
        %846 = vmatmul.bf16.gmra.mxu0 %v692
        %v847 = vpop.f32.mrf.mxu0
        %v848 = vadd.f32 0.0, %v847
        %v849 = vpop.f32.mrf.mxu0
        %v850 = vadd.f32 0.0, %v849
        %851 = vmatmul.bf16.gmra.mxu0 %v695
        %v852 = vpop.f32.mrf.mxu0
        %v853 = vadd.f32 0.0, %v852
        %v854 = vpop.f32.mrf.mxu0
        %v855 = vadd.f32 0.0, %v854
        %856 = vmatmul.bf16.gmra.mxu0 %v698
        %v857 = vpop.f32.mrf.mxu0
        %v858 = vadd.f32 0.0, %v857
        %v859 = vpop.f32.mrf.mxu0
        %v860 = vadd.f32 0.0, %v859
        %861 = vmatmul.bf16.gmra.mxu0 %v701
        %v862 = vpop.f32.mrf.mxu0
        %v863 = vadd.f32 0.0, %v862
        %v864 = vpop.f32.mrf.mxu0
        %v865 = vadd.f32 0.0, %v864
        %866 = vmatmul.bf16.gmra.mxu0 %v704
        %v867 = vpop.f32.mrf.mxu0
        %v868 = vadd.f32 0.0, %v867
        %v869 = vpop.f32.mrf.mxu0
        %v870 = vadd.f32 0.0, %v869
        %871 = vmatmul.bf16.gmra.mxu0 %v707
        %v872 = vpop.f32.mrf.mxu0
        %v873 = vadd.f32 0.0, %v872
        %v874 = vpop.f32.mrf.mxu0
        %v875 = vadd.f32 0.0, %v874
        %876 = vmatmul.bf16.gmra.mxu0 %v710
        %v877 = vpop.f32.mrf.mxu0
        %v878 = vadd.f32 0.0, %v877
        %v879 = vpop.f32.mrf.mxu0
        %v880 = vadd.f32 0.0, %v879
        %881 = vmatmul.bf16.gmra.mxu0 %v713
        %v882 = vpop.f32.mrf.mxu0
        %v883 = vadd.f32 0.0, %v882
        %v884 = vpop.f32.mrf.mxu0
        %v885 = vadd.f32 0.0, %v884
        %886 = vmatmul.bf16.gmra.mxu0 %v716
        %v887 = vpop.f32.mrf.mxu0
        %v888 = vadd.f32 0.0, %v887
        %v889 = vpop.f32.mrf.mxu0
        %v890 = vadd.f32 0.0, %v889
        %891 = vmatmul.bf16.gmra.mxu0 %v719
        %v892 = vpop.f32.mrf.mxu0
        %v893 = vadd.f32 0.0, %v892
        %v894 = vpop.f32.mrf.mxu0
        %v895 = vadd.f32 0.0, %v894
        %896 = vdwg.mxu0
        %v897 = vadd.f32 %v385, %v738
        %v898 = vadd.f32 %v386, %v740
        %v899 = vadd.f32 %v387, %v743
        %v900 = vadd.f32 %v388, %v745
        %v901 = vadd.f32 %v389, %v748
        %v902 = vadd.f32 %v390, %v750
        %v903 = vadd.f32 %v391, %v753
        %v904 = vadd.f32 %v392, %v755
        %v905 = vadd.f32 %v393, %v758
        %v906 = vadd.f32 %v394, %v760
        %v907 = vadd.f32 %v395, %v763
        %v908 = vadd.f32 %v396, %v765
        %v909 = vadd.f32 %v397, %v768
        %v910 = vadd.f32 %v398, %v770
        %v911 = vadd.f32 %v399, %v773
        %v912 = vadd.f32 %v400, %v775
        %v913 = vadd.f32 %v401, %v778
        %v914 = vadd.f32 %v402, %v780
        %v915 = vadd.f32 %v403, %v783
        %v916 = vadd.f32 %v404, %v785
        %v917 = vadd.f32 %v405, %v788
        %v918 = vadd.f32 %v406, %v790
        %v919 = vadd.f32 %v407, %v793
        %v920 = vadd.f32 %v408, %v795
        %v921 = vadd.f32 %v409, %v798
        %v922 = vadd.f32 %v410, %v800
        %v923 = vadd.f32 %v411, %v803
        %v924 = vadd.f32 %v412, %v805
        %v925 = vadd.f32 %v413, %v808
        %v926 = vadd.f32 %v414, %v810
        %v927 = vadd.f32 %v415, %v813
        %v928 = vadd.f32 %v416, %v815
        %v929 = vadd.f32 %v417, %v818
        %v930 = vadd.f32 %v418, %v820
        %v931 = vadd.f32 %v419, %v823
        %v932 = vadd.f32 %v420, %v825
        %v933 = vadd.f32 %v421, %v828
        %v934 = vadd.f32 %v422, %v830
        %v935 = vadd.f32 %v423, %v833
        %v936 = vadd.f32 %v424, %v835
        %v937 = vadd.f32 %v425, %v838
        %v938 = vadd.f32 %v426, %v840
        %v939 = vadd.f32 %v427, %v843
        %v940 = vadd.f32 %v428, %v845
        %v941 = vadd.f32 %v429, %v848
        %v942 = vadd.f32 %v430, %v850
        %v943 = vadd.f32 %v431, %v853
        %v944 = vadd.f32 %v432, %v855
        %v945 = vadd.f32 %v433, %v858
        %v946 = vadd.f32 %v434, %v860
        %v947 = vadd.f32 %v435, %v863
        %v948 = vadd.f32 %v436, %v865
        %v949 = vadd.f32 %v437, %v868
        %v950 = vadd.f32 %v438, %v870
        %v951 = vadd.f32 %v439, %v873
        %v952 = vadd.f32 %v440, %v875
        %v953 = vadd.f32 %v441, %v878
        %v954 = vadd.f32 %v442, %v880
        %v955 = vadd.f32 %v443, %v883
        %v956 = vadd.f32 %v444, %v885
        %v957 = vadd.f32 %v445, %v888
        %v958 = vadd.f32 %v446, %v890
        %v959 = vadd.f32 %v447, %v893
        %v960 = vadd.f32 %v448, %v895
        %vm961 = vcmask 523264
        %962 = vst.msk [vmem:[#allocation2] sm:$0xff] %vm961, %v897
        %963 = vst.msk [vmem:[#allocation2 + $0x8] sm:$0xff] %vm961, %v898
        %964 = vst.msk [vmem:[#allocation2 + $0x10] sm:$0xff] %vm961, %v899
        %965 = vst.msk [vmem:[#allocation2 + $0x18] sm:$0xff] %vm961, %v900
        %966 = vst.msk [vmem:[#allocation2 + $0x20] sm:$0xff] %vm961, %v901
        %967 = vst.msk [vmem:[#allocation2 + $0x28] sm:$0xff] %vm961, %v902
        %968 = vst.msk [vmem:[#allocation2 + $0x30] sm:$0xff] %vm961, %v903
        %969 = vst.msk [vmem:[#allocation2 + $0x38] sm:$0xff] %vm961, %v904
        %970 = vst.msk [vmem:[#allocation2 + $0x40] sm:$0xff] %vm961, %v905
        %971 = vst.msk [vmem:[#allocation2 + $0x48] sm:$0xff] %vm961, %v906
        %972 = vst.msk [vmem:[#allocation2 + $0x50] sm:$0xff] %vm961, %v907
        %973 = vst.msk [vmem:[#allocation2 + $0x58] sm:$0xff] %vm961, %v908
        %974 = vst.msk [vmem:[#allocation2 + $0x60] sm:$0xff] %vm961, %v909
        %975 = vst.msk [vmem:[#allocation2 + $0x68] sm:$0xff] %vm961, %v910
        %976 = vst.msk [vmem:[#allocation2 + $0x70] sm:$0xff] %vm961, %v911
        %977 = vst.msk [vmem:[#allocation2 + $0x78] sm:$0xff] %vm961, %v912
        %978 = vst.msk [vmem:[#allocation2 + $0x80] sm:$0xff] %vm961, %v913
        %979 = vst.msk [vmem:[#allocation2 + $0x88] sm:$0xff] %vm961, %v914
        %980 = vst.msk [vmem:[#allocation2 + $0x90] sm:$0xff] %vm961, %v915
        %981 = vst.msk [vmem:[#allocation2 + $0x98] sm:$0xff] %vm961, %v916
        %982 = vst.msk [vmem:[#allocation2 + $0xa0] sm:$0xff] %vm961, %v917
        %983 = vst.msk [vmem:[#allocation2 + $0xa8] sm:$0xff] %vm961, %v918
        %984 = vst.msk [vmem:[#allocation2 + $0xb0] sm:$0xff] %vm961, %v919
        %985 = vst.msk [vmem:[#allocation2 + $0xb8] sm:$0xff] %vm961, %v920
        %986 = vst.msk [vmem:[#allocation2 + $0xc0] sm:$0xff] %vm961, %v921
        %987 = vst.msk [vmem:[#allocation2 + $0xc8] sm:$0xff] %vm961, %v922
        %988 = vst.msk [vmem:[#allocation2 + $0xd0] sm:$0xff] %vm961, %v923
        %989 = vst.msk [vmem:[#allocation2 + $0xd8] sm:$0xff] %vm961, %v924
        %990 = vst.msk [vmem:[#allocation2 + $0xe0] sm:$0xff] %vm961, %v925
        %991 = vst.msk [vmem:[#allocation2 + $0xe8] sm:$0xff] %vm961, %v926
        %992 = vst.msk [vmem:[#allocation2 + $0xf0] sm:$0xff] %vm961, %v927
        %993 = vst.msk [vmem:[#allocation2 + $0xf8] sm:$0xff] %vm961, %v928
        %994 = vst.msk [vmem:[#allocation2 + $0x100] sm:$0xff] %vm961, %v929
        %995 = vst.msk [vmem:[#allocation2 + $0x108] sm:$0xff] %vm961, %v930
        %996 = vst.msk [vmem:[#allocation2 + $0x110] sm:$0xff] %vm961, %v931
        %997 = vst.msk [vmem:[#allocation2 + $0x118] sm:$0xff] %vm961, %v932
        %998 = vst.msk [vmem:[#allocation2 + $0x120] sm:$0xff] %vm961, %v933
        %999 = vst.msk [vmem:[#allocation2 + $0x128] sm:$0xff] %vm961, %v934
        %1000 = vst.msk [vmem:[#allocation2 + $0x130] sm:$0xff] %vm961, %v935
        %1001 = vst.msk [vmem:[#allocation2 + $0x138] sm:$0xff] %vm961, %v936
        %1002 = vst.msk [vmem:[#allocation2 + $0x140] sm:$0xff] %vm961, %v937
        %1003 = vst.msk [vmem:[#allocation2 + $0x148] sm:$0xff] %vm961, %v938
        %1004 = vst.msk [vmem:[#allocation2 + $0x150] sm:$0xff] %vm961, %v939
        %1005 = vst.msk [vmem:[#allocation2 + $0x158] sm:$0xff] %vm961, %v940
        %1006 = vst.msk [vmem:[#allocation2 + $0x160] sm:$0xff] %vm961, %v941
        %1007 = vst.msk [vmem:[#allocation2 + $0x168] sm:$0xff] %vm961, %v942
        %1008 = vst.msk [vmem:[#allocation2 + $0x170] sm:$0xff] %vm961, %v943
        %1009 = vst.msk [vmem:[#allocation2 + $0x178] sm:$0xff] %vm961, %v944
        %1010 = vst.msk [vmem:[#allocation2 + $0x180] sm:$0xff] %vm961, %v945
        %1011 = vst.msk [vmem:[#allocation2 + $0x188] sm:$0xff] %vm961, %v946
        %1012 = vst.msk [vmem:[#allocation2 + $0x190] sm:$0xff] %vm961, %v947
        %1013 = vst.msk [vmem:[#allocation2 + $0x198] sm:$0xff] %vm961, %v948
        %1014 = vst.msk [vmem:[#allocation2 + $0x1a0] sm:$0xff] %vm961, %v949
        %1015 = vst.msk [vmem:[#allocation2 + $0x1a8] sm:$0xff] %vm961, %v950
        %1016 = vst.msk [vmem:[#allocation2 + $0x1b0] sm:$0xff] %vm961, %v951
        %1017 = vst.msk [vmem:[#allocation2 + $0x1b8] sm:$0xff] %vm961, %v952
        %1018 = vst.msk [vmem:[#allocation2 + $0x1c0] sm:$0xff] %vm961, %v953
        %1019 = vst.msk [vmem:[#allocation2 + $0x1c8] sm:$0xff] %vm961, %v954
        %1020 = vst.msk [vmem:[#allocation2 + $0x1d0] sm:$0xff] %vm961, %v955
        %1021 = vst.msk [vmem:[#allocation2 + $0x1d8] sm:$0xff] %vm961, %v956
        %1022 = vst.msk [vmem:[#allocation2 + $0x1e0] sm:$0xff] %vm961, %v957
        %1023 = vst.msk [vmem:[#allocation2 + $0x1e8] sm:$0xff] %vm961, %v958
        %1024 = vst.msk [vmem:[#allocation2 + $0x1f0] sm:$0xff] %vm961, %v959
        %1025 = vst.msk [vmem:[#allocation2 + $0x1f8] sm:$0xff] %vm961, %v960
        // Predicated region
        $region37: #{_conv_fwd_impl.1} parent=31 // pred_check
          %p1026 = pneg %p252
        $region38: #{_conv_fwd_impl.1} parent=31 // pred_check_branch
          %1028 = sbr.rel (%p1026) target = $region40
        $region39: #{_conv_fwd_impl.1} parent=31 // pred_region
          %v1029 = vld [vmem:[#allocation2] sm:$0xff]
          %v1030 = vld [vmem:[#allocation2 + $0x8] sm:$0xff]
          %v1031 = vld [vmem:[#allocation2 + $0x10] sm:$0xff]
          %v1032 = vld [vmem:[#allocation2 + $0x18] sm:$0xff]
          %v1033 = vld [vmem:[#allocation2 + $0x20] sm:$0xff]
          %v1034 = vld [vmem:[#allocation2 + $0x28] sm:$0xff]
          %v1035 = vld [vmem:[#allocation2 + $0x30] sm:$0xff]
          %v1036 = vld [vmem:[#allocation2 + $0x38] sm:$0xff]
          %v1037 = vld [vmem:[#allocation2 + $0x40] sm:$0xff]
          %v1038 = vld [vmem:[#allocation2 + $0x48] sm:$0xff]
          %v1039 = vld [vmem:[#allocation2 + $0x50] sm:$0xff]
          %v1040 = vld [vmem:[#allocation2 + $0x58] sm:$0xff]
          %v1041 = vld [vmem:[#allocation2 + $0x60] sm:$0xff]
          %v1042 = vld [vmem:[#allocation2 + $0x68] sm:$0xff]
          %v1043 = vld [vmem:[#allocation2 + $0x70] sm:$0xff]
          %v1044 = vld [vmem:[#allocation2 + $0x78] sm:$0xff]
          %v1045 = vld [vmem:[#allocation2 + $0x80] sm:$0xff]
          %v1046 = vld [vmem:[#allocation2 + $0x88] sm:$0xff]
          %v1047 = vld [vmem:[#allocation2 + $0x90] sm:$0xff]
          %v1048 = vld [vmem:[#allocation2 + $0x98] sm:$0xff]
          %v1049 = vld [vmem:[#allocation2 + $0xa0] sm:$0xff]
          %v1050 = vld [vmem:[#allocation2 + $0xa8] sm:$0xff]
          %v1051 = vld [vmem:[#allocation2 + $0xb0] sm:$0xff]
          %v1052 = vld [vmem:[#allocation2 + $0xb8] sm:$0xff]
          %v1053 = vld [vmem:[#allocation2 + $0xc0] sm:$0xff]
          %v1054 = vld [vmem:[#allocation2 + $0xc8] sm:$0xff]
          %v1055 = vld [vmem:[#allocation2 + $0xd0] sm:$0xff]
          %v1056 = vld [vmem:[#allocation2 + $0xd8] sm:$0xff]
          %v1057 = vld [vmem:[#allocation2 + $0xe0] sm:$0xff]
          %v1058 = vld [vmem:[#allocation2 + $0xe8] sm:$0xff]
          %v1059 = vld [vmem:[#allocation2 + $0xf0] sm:$0xff]
          %v1060 = vld [vmem:[#allocation2 + $0xf8] sm:$0xff]
          %v1061 = vld [vmem:[#allocation2 + $0x100] sm:$0xff]
          %v1062 = vld [vmem:[#allocation2 + $0x108] sm:$0xff]
          %v1063 = vld [vmem:[#allocation2 + $0x110] sm:$0xff]
          %v1064 = vld [vmem:[#allocation2 + $0x118] sm:$0xff]
          %v1065 = vld [vmem:[#allocation2 + $0x120] sm:$0xff]
          %v1066 = vld [vmem:[#allocation2 + $0x128] sm:$0xff]
          %v1067 = vld [vmem:[#allocation2 + $0x130] sm:$0xff]
          %v1068 = vld [vmem:[#allocation2 + $0x138] sm:$0xff]
          %v1069 = vld [vmem:[#allocation2 + $0x140] sm:$0xff]
          %v1070 = vld [vmem:[#allocation2 + $0x148] sm:$0xff]
          %v1071 = vld [vmem:[#allocation2 + $0x150] sm:$0xff]
          %v1072 = vld [vmem:[#allocation2 + $0x158] sm:$0xff]
          %v1073 = vld [vmem:[#allocation2 + $0x160] sm:$0xff]
          %v1074 = vld [vmem:[#allocation2 + $0x168] sm:$0xff]
          %v1075 = vld [vmem:[#allocation2 + $0x170] sm:$0xff]
          %v1076 = vld [vmem:[#allocation2 + $0x178] sm:$0xff]
          %v1077 = vld [vmem:[#allocation2 + $0x180] sm:$0xff]
          %v1078 = vld [vmem:[#allocation2 + $0x188] sm:$0xff]
          %v1079 = vld [vmem:[#allocation2 + $0x190] sm:$0xff]
          %v1080 = vld [vmem:[#allocation2 + $0x198] sm:$0xff]
          %v1081 = vld [vmem:[#allocation2 + $0x1a0] sm:$0xff]
          %v1082 = vld [vmem:[#allocation2 + $0x1a8] sm:$0xff]
          %v1083 = vld [vmem:[#allocation2 + $0x1b0] sm:$0xff]
          %v1084 = vld [vmem:[#allocation2 + $0x1b8] sm:$0xff]
          %v1085 = vld [vmem:[#allocation2 + $0x1c0] sm:$0xff]
          %v1086 = vld [vmem:[#allocation2 + $0x1c8] sm:$0xff]
          %v1087 = vld [vmem:[#allocation2 + $0x1d0] sm:$0xff]
          %v1088 = vld [vmem:[#allocation2 + $0x1d8] sm:$0xff]
          %v1089 = vld [vmem:[#allocation2 + $0x1e0] sm:$0xff]
          %v1090 = vld [vmem:[#allocation2 + $0x1e8] sm:$0xff]
          %v1091 = vld [vmem:[#allocation2 + $0x1f0] sm:$0xff]
          %v1092 = vld [vmem:[#allocation2 + $0x1f8] sm:$0xff]
          %v1093 = vld [vmem:[%s249] sm:$0x1]
          %v1095 = vperm.slane %v1093, 0
          %v1097 = vadd.f32 %v1029, %v1095
          %v1098 = vadd.f32 %v1030, %v1095
          %v1099 = vadd.f32 %v1031, %v1095
          %v1100 = vadd.f32 %v1032, %v1095
          %v1101 = vadd.f32 %v1033, %v1095
          %v1102 = vadd.f32 %v1034, %v1095
          %v1103 = vadd.f32 %v1035, %v1095
          %v1104 = vadd.f32 %v1036, %v1095
          %v1105 = vadd.f32 %v1037, %v1095
          %v1106 = vadd.f32 %v1038, %v1095
          %v1107 = vadd.f32 %v1039, %v1095
          %v1108 = vadd.f32 %v1040, %v1095
          %v1109 = vadd.f32 %v1041, %v1095
          %v1110 = vadd.f32 %v1042, %v1095
          %v1111 = vadd.f32 %v1043, %v1095
          %v1112 = vadd.f32 %v1044, %v1095
          %v1113 = vadd.f32 %v1045, %v1095
          %v1114 = vadd.f32 %v1046, %v1095
          %v1115 = vadd.f32 %v1047, %v1095
          %v1116 = vadd.f32 %v1048, %v1095
          %v1117 = vadd.f32 %v1049, %v1095
          %v1118 = vadd.f32 %v1050, %v1095
          %v1119 = vadd.f32 %v1051, %v1095
          %v1120 = vadd.f32 %v1052, %v1095
          %v1121 = vadd.f32 %v1053, %v1095
          %v1122 = vadd.f32 %v1054, %v1095
          %v1123 = vadd.f32 %v1055, %v1095
          %v1124 = vadd.f32 %v1056, %v1095
          %v1125 = vadd.f32 %v1057, %v1095
          %v1126 = vadd.f32 %v1058, %v1095
          %v1127 = vadd.f32 %v1059, %v1095
          %v1128 = vadd.f32 %v1060, %v1095
          %v1129 = vadd.f32 %v1061, %v1095
          %v1130 = vadd.f32 %v1062, %v1095
          %v1131 = vadd.f32 %v1063, %v1095
          %v1132 = vadd.f32 %v1064, %v1095
          %v1133 = vadd.f32 %v1065, %v1095
          %v1134 = vadd.f32 %v1066, %v1095
          %v1135 = vadd.f32 %v1067, %v1095
          %v1136 = vadd.f32 %v1068, %v1095
          %v1137 = vadd.f32 %v1069, %v1095
          %v1138 = vadd.f32 %v1070, %v1095
          %v1139 = vadd.f32 %v1071, %v1095
          %v1140 = vadd.f32 %v1072, %v1095
          %v1141 = vadd.f32 %v1073, %v1095
          %v1142 = vadd.f32 %v1074, %v1095
          %v1143 = vadd.f32 %v1075, %v1095
          %v1144 = vadd.f32 %v1076, %v1095
          %v1145 = vadd.f32 %v1077, %v1095
          %v1146 = vadd.f32 %v1078, %v1095
          %v1147 = vadd.f32 %v1079, %v1095
          %v1148 = vadd.f32 %v1080, %v1095
          %v1149 = vadd.f32 %v1081, %v1095
          %v1150 = vadd.f32 %v1082, %v1095
          %v1151 = vadd.f32 %v1083, %v1095
          %v1152 = vadd.f32 %v1084, %v1095
          %v1153 = vadd.f32 %v1085, %v1095
          %v1154 = vadd.f32 %v1086, %v1095
          %v1155 = vadd.f32 %v1087, %v1095
          %v1156 = vadd.f32 %v1088, %v1095
          %v1157 = vadd.f32 %v1089, %v1095
          %v1158 = vadd.f32 %v1090, %v1095
          %v1159 = vadd.f32 %v1091, %v1095
          %v1160 = vadd.f32 %v1092, %v1095
          %v1161 = vmax.f32 %v1097, 0.0
          %v1162 = vmax.f32 %v1098, 0.0
          %v1163 = vmax.f32 %v1099, 0.0
          %v1164 = vmax.f32 %v1100, 0.0
          %v1165 = vmax.f32 %v1101, 0.0
          %v1166 = vmax.f32 %v1102, 0.0
          %v1167 = vmax.f32 %v1103, 0.0
          %v1168 = vmax.f32 %v1104, 0.0
          %v1169 = vmax.f32 %v1105, 0.0
          %v1170 = vmax.f32 %v1106, 0.0
          %v1171 = vmax.f32 %v1107, 0.0
          %v1172 = vmax.f32 %v1108, 0.0
          %v1173 = vmax.f32 %v1109, 0.0
          %v1174 = vmax.f32 %v1110, 0.0
          %v1175 = vmax.f32 %v1111, 0.0
          %v1176 = vmax.f32 %v1112, 0.0
          %v1177 = vmax.f32 %v1113, 0.0
          %v1178 = vmax.f32 %v1114, 0.0
          %v1179 = vmax.f32 %v1115, 0.0
          %v1180 = vmax.f32 %v1116, 0.0
          %v1181 = vmax.f32 %v1117, 0.0
          %v1182 = vmax.f32 %v1118, 0.0
          %v1183 = vmax.f32 %v1119, 0.0
          %v1184 = vmax.f32 %v1120, 0.0
          %v1185 = vmax.f32 %v1121, 0.0
          %v1186 = vmax.f32 %v1122, 0.0
          %v1187 = vmax.f32 %v1123, 0.0
          %v1188 = vmax.f32 %v1124, 0.0
          %v1189 = vmax.f32 %v1125, 0.0
          %v1190 = vmax.f32 %v1126, 0.0
          %v1191 = vmax.f32 %v1127, 0.0
          %v1192 = vmax.f32 %v1128, 0.0
          %v1193 = vmax.f32 %v1129, 0.0
          %v1194 = vmax.f32 %v1130, 0.0
          %v1195 = vmax.f32 %v1131, 0.0
          %v1196 = vmax.f32 %v1132, 0.0
          %v1197 = vmax.f32 %v1133, 0.0
          %v1198 = vmax.f32 %v1134, 0.0
          %v1199 = vmax.f32 %v1135, 0.0
          %v1200 = vmax.f32 %v1136, 0.0
          %v1201 = vmax.f32 %v1137, 0.0
          %v1202 = vmax.f32 %v1138, 0.0
          %v1203 = vmax.f32 %v1139, 0.0
          %v1204 = vmax.f32 %v1140, 0.0
          %v1205 = vmax.f32 %v1141, 0.0
          %v1206 = vmax.f32 %v1142, 0.0
          %v1207 = vmax.f32 %v1143, 0.0
          %v1208 = vmax.f32 %v1144, 0.0
          %v1209 = vmax.f32 %v1145, 0.0
          %v1210 = vmax.f32 %v1146, 0.0
          %v1211 = vmax.f32 %v1147, 0.0
          %v1212 = vmax.f32 %v1148, 0.0
          %v1213 = vmax.f32 %v1149, 0.0
          %v1214 = vmax.f32 %v1150, 0.0
          %v1215 = vmax.f32 %v1151, 0.0
          %v1216 = vmax.f32 %v1152, 0.0
          %v1217 = vmax.f32 %v1153, 0.0
          %v1218 = vmax.f32 %v1154, 0.0
          %v1219 = vmax.f32 %v1155, 0.0
          %v1220 = vmax.f32 %v1156, 0.0
          %v1221 = vmax.f32 %v1157, 0.0
          %v1222 = vmax.f32 %v1158, 0.0
          %v1223 = vmax.f32 %v1159, 0.0
          %v1224 = vmax.f32 %v1160, 0.0
          %1225 = vst.msk [vmem:[%s228] sm:$0xff] %vm961, %v1161
          %1226 = vst.msk [vmem:[%s228 + $0x8] sm:$0xff] %vm961, %v1162
          %1227 = vst.msk [vmem:[%s228 + $0x10] sm:$0xff] %vm961, %v1163
          %1228 = vst.msk [vmem:[%s228 + $0x18] sm:$0xff] %vm961, %v1164
          %1229 = vst.msk [vmem:[%s228 + $0x20] sm:$0xff] %vm961, %v1165
          %1230 = vst.msk [vmem:[%s228 + $0x28] sm:$0xff] %vm961, %v1166
          %1231 = vst.msk [vmem:[%s228 + $0x30] sm:$0xff] %vm961, %v1167
          %1232 = vst.msk [vmem:[%s228 + $0x38] sm:$0xff] %vm961, %v1168
          %1233 = vst.msk [vmem:[%s228 + $0x40] sm:$0xff] %vm961, %v1169
          %1234 = vst.msk [vmem:[%s228 + $0x48] sm:$0xff] %vm961, %v1170
          %1235 = vst.msk [vmem:[%s228 + $0x50] sm:$0xff] %vm961, %v1171
          %1236 = vst.msk [vmem:[%s228 + $0x58] sm:$0xff] %vm961, %v1172
          %1237 = vst.msk [vmem:[%s228 + $0x60] sm:$0xff] %vm961, %v1173
          %1238 = vst.msk [vmem:[%s228 + $0x68] sm:$0xff] %vm961, %v1174
          %1239 = vst.msk [vmem:[%s228 + $0x70] sm:$0xff] %vm961, %v1175
          %1240 = vst.msk [vmem:[%s228 + $0x78] sm:$0xff] %vm961, %v1176
          %1241 = vst.msk [vmem:[%s228 + $0x80] sm:$0xff] %vm961, %v1177
          %1242 = vst.msk [vmem:[%s228 + $0x88] sm:$0xff] %vm961, %v1178
          %1243 = vst.msk [vmem:[%s228 + $0x90] sm:$0xff] %vm961, %v1179
          %1244 = vst.msk [vmem:[%s228 + $0x98] sm:$0xff] %vm961, %v1180
          %1245 = vst.msk [vmem:[%s228 + $0xa0] sm:$0xff] %vm961, %v1181
          %1246 = vst.msk [vmem:[%s228 + $0xa8] sm:$0xff] %vm961, %v1182
          %1247 = vst.msk [vmem:[%s228 + $0xb0] sm:$0xff] %vm961, %v1183
          %1248 = vst.msk [vmem:[%s228 + $0xb8] sm:$0xff] %vm961, %v1184
          %1249 = vst.msk [vmem:[%s228 + $0xc0] sm:$0xff] %vm961, %v1185
          %1250 = vst.msk [vmem:[%s228 + $0xc8] sm:$0xff] %vm961, %v1186
          %1251 = vst.msk [vmem:[%s228 + $0xd0] sm:$0xff] %vm961, %v1187
          %1252 = vst.msk [vmem:[%s228 + $0xd8] sm:$0xff] %vm961, %v1188
          %1253 = vst.msk [vmem:[%s228 + $0xe0] sm:$0xff] %vm961, %v1189
          %1254 = vst.msk [vmem:[%s228 + $0xe8] sm:$0xff] %vm961, %v1190
          %1255 = vst.msk [vmem:[%s228 + $0xf0] sm:$0xff] %vm961, %v1191
          %1256 = vst.msk [vmem:[%s228 + $0xf8] sm:$0xff] %vm961, %v1192
          %1257 = vst.msk [vmem:[%s228 + $0x100] sm:$0xff] %vm961, %v1193
          %1258 = vst.msk [vmem:[%s228 + $0x108] sm:$0xff] %vm961, %v1194
          %1259 = vst.msk [vmem:[%s228 + $0x110] sm:$0xff] %vm961, %v1195
          %1260 = vst.msk [vmem:[%s228 + $0x118] sm:$0xff] %vm961, %v1196
          %1261 = vst.msk [vmem:[%s228 + $0x120] sm:$0xff] %vm961, %v1197
          %1262 = vst.msk [vmem:[%s228 + $0x128] sm:$0xff] %vm961, %v1198
          %1263 = vst.msk [vmem:[%s228 + $0x130] sm:$0xff] %vm961, %v1199
          %1264 = vst.msk [vmem:[%s228 + $0x138] sm:$0xff] %vm961, %v1200
          %1265 = vst.msk [vmem:[%s228 + $0x140] sm:$0xff] %vm961, %v1201
          %1266 = vst.msk [vmem:[%s228 + $0x148] sm:$0xff] %vm961, %v1202
          %1267 = vst.msk [vmem:[%s228 + $0x150] sm:$0xff] %vm961, %v1203
          %1268 = vst.msk [vmem:[%s228 + $0x158] sm:$0xff] %vm961, %v1204
          %1269 = vst.msk [vmem:[%s228 + $0x160] sm:$0xff] %vm961, %v1205
          %1270 = vst.msk [vmem:[%s228 + $0x168] sm:$0xff] %vm961, %v1206
          %1271 = vst.msk [vmem:[%s228 + $0x170] sm:$0xff] %vm961, %v1207
          %1272 = vst.msk [vmem:[%s228 + $0x178] sm:$0xff] %vm961, %v1208
          %1273 = vst.msk [vmem:[%s228 + $0x180] sm:$0xff] %vm961, %v1209
          %1274 = vst.msk [vmem:[%s228 + $0x188] sm:$0xff] %vm961, %v1210
          %1275 = vst.msk [vmem:[%s228 + $0x190] sm:$0xff] %vm961, %v1211
          %1276 = vst.msk [vmem:[%s228 + $0x198] sm:$0xff] %vm961, %v1212
          %1277 = vst.msk [vmem:[%s228 + $0x1a0] sm:$0xff] %vm961, %v1213
          %1278 = vst.msk [vmem:[%s228 + $0x1a8] sm:$0xff] %vm961, %v1214
          %1279 = vst.msk [vmem:[%s228 + $0x1b0] sm:$0xff] %vm961, %v1215
          %1280 = vst.msk [vmem:[%s228 + $0x1b8] sm:$0xff] %vm961, %v1216
          %1281 = vst.msk [vmem:[%s228 + $0x1c0] sm:$0xff] %vm961, %v1217
          %1282 = vst.msk [vmem:[%s228 + $0x1c8] sm:$0xff] %vm961, %v1218
          %1283 = vst.msk [vmem:[%s228 + $0x1d0] sm:$0xff] %vm961, %v1219
          %1284 = vst.msk [vmem:[%s228 + $0x1d8] sm:$0xff] %vm961, %v1220
          %1285 = vst.msk [vmem:[%s228 + $0x1e0] sm:$0xff] %vm961, %v1221
          %1286 = vst.msk [vmem:[%s228 + $0x1e8] sm:$0xff] %vm961, %v1222
          %1287 = vst.msk [vmem:[%s228 + $0x1f0] sm:$0xff] %vm961, %v1223
          %1288 = vst.msk [vmem:[%s228 + $0x1f8] sm:$0xff] %vm961, %v1224
        $region40: #{_conv_fwd_impl.1} parent=31 // pred_fallthru
          _
        %s1289 = sand.u32 %s128, 1
        %s1290 = scalar_lea.sflag [#allocation4], %s1289
        %s1291 = sand.u32 %s128, 1
        %s1292 = smul.addr %s1291, 512
        %s1293 = scalar_lea.vmem [#allocation3], %s1292
        // Predicated region
        $region41: #{_conv_fwd_impl.1} parent=31 // pred_check
          %p1294 = pneg %p138
        $region42: #{_conv_fwd_impl.1} parent=31 // pred_check_branch
          %1296 = sbr.rel (%p1294) target = $region44
        $region43: #{_conv_fwd_impl.1} parent=31 // pred_region
          %s1297 = smul.u32 64, %s22
          %1299 = vsyncadd %s1290, 0
          %s1300 = sadd.s32 %s23, %s1297
          %s1301 = smul.addr %s1300, 8
          %s1302 = scalar_lea.hbm %s3, %s1301
          %s1303 = sshll.u32 %s1293, 4
          %s1304 = int_to_ptr.vmem [resolvable:$true] %s1303
          %s1305 = sshll.u32 %s1302, 4
          %s1306 = int_to_ptr.hbm [resolvable:$true] %s1305
          %1311 = dma.vmem_to_hbm [thread:$0]  %s1304, 8192, %s1306, %s1290, 128, 128, 8
        $region44: #{_conv_fwd_impl.1} parent=31 // pred_fallthru
          _
      $region32: #{_conv_fwd_impl.1} parent=5 // pred_fallthru
        _
      %p1312 = scmp.le.s32.totalorder 2, %s12
      // Predicated region
      $region45: #{_conv_fwd_impl.1} parent=5 // pred_check
        %p1313 = pneg %p1312
      $region46: #{_conv_fwd_impl.1} parent=5 // pred_check_branch
        %1315 = sbr.rel (%p1313) target = $region48
      $region47: #{_conv_fwd_impl.1} parent=5 // pred_region
        %s1316 = ssub.s32 %s12, 2
        // Predicated region
        $region49: #{_conv_fwd_impl.1} parent=47 // pred_check
          %p1317 = pneg %p144
        $region50: #{_conv_fwd_impl.1} parent=47 // pred_check_branch
          %1319 = sbr.rel (%p1317) target = $region52
        $region51: #{_conv_fwd_impl.1} parent=47 // pred_region
          %s1320 = sand.u32 %s129, 1
          %s1321 = scalar_lea.sflag [#allocation4], %s1320
          %s1322 = sand.u32 %s129, 1
          %s1323 = smul.addr %s1322, 512
          %s1324 = scalar_lea.vmem [#allocation3], %s1323
          %1326 = dma.done %s1321, 8192
        $region52: #{_conv_fwd_impl.1} parent=47 // pred_fallthru
          _
      $region48: #{_conv_fwd_impl.1} parent=5 // pred_fallthru
        _
    $region6: #{_conv_fwd_impl.1} parent=1 // loop_footer
      %s16 = sadd.s32 1, %s12
    $region7: #{_conv_fwd_impl.1} parent=1 // loop_footer_branch
      %11 = sbr.rel target = $region3
    $region8: #{_conv_fwd_impl.1} parent=1 // loop_exit
      _
    %1327 = vsyncpa [#allocation4], 1
    %s1328 = scalar_lea.sflag [#allocation4], 1
    %1329 = vsyncpa %s1328, 1

</llo_original>
